<compile_context>
chip_gen: v5e
topology: v5e:2x2
jax: 0.10.0
libtpu: 0.0.40
codegen_flags: <defaults>
</compile_context>

<pallas_src>
import functools

import jax
import jax.numpy as jnp
from jax.experimental import pallas as pl
from jax.experimental.pallas import tpu as pltpu


def _round_up(n, m):
    return ((n + m - 1) // m) * m


def _pad_to(a, shape):
    return jnp.pad(a, [(0, s - d) for d, s in zip(a.shape, shape)])


def _num_tensorcores():
    """Best-effort TensorCore count; default 1 (no batch split) if unknown."""
    try:
        info = pltpu.get_tpu_info()
        for attr in ("num_cores", "core_count", "num_tensorcores",
                     "tensorcores_per_chip"):
            v = getattr(info, attr, None)
            if v:
                return int(v)
    except Exception:
        pass
    return 1


_NUM_TC = _num_tensorcores()

# Padded (in, out) widths per layer (lane-aligned, zero padded).
_PADDED_DIMS = {
    "rbm1":   (784, 512),
    "rbm2":   (512, 256),
    "rbm3":   (256, 128),
    "output": (128, 128),
}
_N_OUT = 10  # true logits width


# --------------------------------------------------------------------------
# One-time parameter preparation (hoisted out of the per-call path).
# --------------------------------------------------------------------------
def prepare_params(params):
    """Zero-pad weights/biases to lane-aligned widths, cast weights to bf16.

    Call ONCE; reuse the returned tuple for every dbn_forward call."""
    padded = []
    for name in ("rbm1", "rbm2", "rbm3", "output"):
        w, b = params[name]
        in_p, out_p = _PADDED_DIMS[name]
        padded.append(_pad_to(w, (in_p, out_p)).astype(jnp.bfloat16))
        padded.append(_pad_to(b, (1, out_p)).astype(jnp.float32))
    return tuple(jax.device_put(p) for p in padded)


# --------------------------------------------------------------------------
# Kernel
# --------------------------------------------------------------------------
def _sigmoid(x):
    # exp -> EUP, approx reciprocal -> EUP; keeps the VPU slot free.
    return pl.reciprocal(1.0 + jnp.exp(-x), approx=True)


def _dbn_kernel(x_ref,
                w1_ref, b1_ref,
                w2_ref, b2_ref,
                w3_ref, b3_ref,
                w4_ref, b4_ref,
                out_ref):
    # bf16 operands on the MXU, f32 accumulation, f32 sigmoid.
    x = x_ref[...].astype(jnp.bfloat16)  # no-op if x already arrives bf16

    # Layer 1: 784 -> 512(=500 padded), sigmoid
    h = _sigmoid(jnp.dot(x, w1_ref[...],
                         preferred_element_type=jnp.float32) + b1_ref[...])
    # Layer 2: 512 -> 256(=200 padded), sigmoid
    h = _sigmoid(jnp.dot(h.astype(jnp.bfloat16), w2_ref[...],
                         preferred_element_type=jnp.float32) + b2_ref[...])
    # Layer 3: 256 -> 128(=50 padded), sigmoid
    h = _sigmoid(jnp.dot(h.astype(jnp.bfloat16), w3_ref[...],
                         preferred_element_type=jnp.float32) + b3_ref[...])
    # Output layer: 128 -> 128(=10 padded), no activation
    out = jnp.dot(h.astype(jnp.bfloat16), w4_ref[...],
                  preferred_element_type=jnp.float32) + b4_ref[...]
    # Store only the 10 real logits (masked vst; avoids padded-output HBM
    # traffic and the post-kernel slice pass).
    out_ref[...] = out[:, :_N_OUT].astype(out_ref.dtype)


# --------------------------------------------------------------------------
# Wrapper
# --------------------------------------------------------------------------
@functools.partial(jax.jit, static_argnames=("block_b",))
def dbn_forward(x, padded_params, block_b=512):
    """x: [B, 784] float32 or bfloat16. padded_params: output of prepare_params.

    Returns [B, 10] float32 logits."""
    B, D_in = x.shape
    assert D_in == 784

    # Clamp the batch tile for small batches (don't pad B=2 up to 512 rows).
    block_b = min(block_b, _round_up(B, 8))
    # Only split the batch into multiple grid steps when the chip actually has
    # multiple TensorCores (v7x); on v5e/v6e the grid is a serial loop and a
    # split is pure overhead.
    if _NUM_TC > 1 and B >= _NUM_TC * 128:
        steps = -(-B // block_b)
        if steps < _NUM_TC:
            block_b = _round_up(-(-B // _NUM_TC), 8)

    B_pad = _round_up(B, block_b)
    if B_pad != B:
        x = jnp.pad(x, ((0, B_pad - B), (0, 0)))

    w1, b1, w2, b2, w3, b3, w4, b4 = padded_params
    const2d = lambda a: pl.BlockSpec(a.shape, lambda i: (0, 0))

    out = pl.pallas_call(
        _dbn_kernel,
        out_shape=jax.ShapeDtypeStruct((B_pad, _N_OUT), jnp.float32),
        grid_spec=pltpu.PrefetchScalarGridSpec(
            num_scalar_prefetch=0,
            grid=(B_pad // block_b,),
            in_specs=[
                pl.BlockSpec((block_b, 784), lambda i: (i, 0)),   # x tile
                const2d(w1), const2d(b1),
                const2d(w2), const2d(b2),
                const2d(w3), const2d(b3),
                const2d(w4), const2d(b4),
            ],
            # last dim (10) equals the full array dim -> valid narrow block
            out_specs=pl.BlockSpec((block_b, _N_OUT), lambda i: (i, 0)),
        ),
        compiler_params=pltpu.CompilerParams(
            dimension_semantics=("parallel",)),
    )(x, w1, b1, w2, b2, w3, b3, w4, b4)

    return out if B_pad == B else out[:B]


# --------------------------------------------------------------------------
# Init + pure-JAX reference + self-test
# --------------------------------------------------------------------------
def init_params(key):
    """PyTorch nn.Linear default init: U(-1/sqrt(fan_in), 1/sqrt(fan_in)).
    Weights stored as [in, out] (transposed relative to torch)."""
    dims = [("rbm1", 784, 500), ("rbm2", 500, 200),
            ("rbm3", 200, 50), ("output", 50, 10)]
    params = {}
    for name, fan_in, fan_out in dims:
        key, kw, kb = jax.random.split(key, 3)
        bound = 1.0 / (fan_in ** 0.5)
        w = jax.random.uniform(kw, (fan_in, fan_out), jnp.float32,
                               minval=-bound, maxval=bound)
        b = jax.random.uniform(kb, (1, fan_out), jnp.float32,
                               minval=-bound, maxval=bound)
        params[name] = (w, b)
    return params


def dbn_reference(x, params):
    h = jax.nn.sigmoid(x @ params["rbm1"][0] + params["rbm1"][1])
    h = jax.nn.sigmoid(h @ params["rbm2"][0] + params["rbm2"][1])
    h = jax.nn.sigmoid(h @ params["rbm3"][0] + params["rbm3"][1])
    return h @ params["output"][0] + params["output"][1]


if __name__ == "__main__":
    key = jax.random.PRNGKey(0)
    key, kx, kx2 = jax.random.split(key, 3)
    params = init_params(key)
    padded_params = prepare_params(params)   # one-time prep, reused below

    # Small inference-style batch (exercises the tile-clamping path).
    B = 2
    x = jax.random.uniform(kx, (B, 784), jnp.float32)   # MNIST-like flat input
    out = jax.block_until_ready(dbn_forward(x, padded_params))
    ref = dbn_reference(x, params)
    assert out.shape == (B, 10), out.shape
    # bf16 matmul operands + approx reciprocal -> slightly looser tolerance.
    assert jnp.allclose(out, ref, atol=2e-2, rtol=2e-2), (
        float(jnp.max(jnp.abs(out - ref))))

    # Larger batch (exercises batch padding, multi-step grid on padded rows).
    B2 = 640
    x2 = jax.random.uniform(kx2, (B2, 784), jnp.float32)
    out2 = jax.block_until_ready(dbn_forward(x2, padded_params))
    ref2 = dbn_reference(x2, params)
    assert out2.shape == (B2, 10), out2.shape
    assert jnp.allclose(out2, ref2, atol=2e-2, rtol=2e-2), (
        float(jnp.max(jnp.abs(out2 - ref2))))

    print("KERNEL_OK")
</pallas_src>

<mosaic_0001>
module attributes {stable_mosaic.version = 11 : i64} {
  func.func @_dbn_kernel(%arg0: i32, %arg1: memref<8x784xf32, #tpu.memory_space<vmem>>, %arg2: memref<784x512xbf16, #tpu.memory_space<vmem>>, %arg3: memref<1x512xf32, #tpu.memory_space<vmem>>, %arg4: memref<512x256xbf16, #tpu.memory_space<vmem>>, %arg5: memref<1x256xf32, #tpu.memory_space<vmem>>, %arg6: memref<256x128xbf16, #tpu.memory_space<vmem>>, %arg7: memref<1x128xf32, #tpu.memory_space<vmem>>, %arg8: memref<128x128xbf16, #tpu.memory_space<vmem>>, %arg9: memref<1x128xf32, #tpu.memory_space<vmem>>, %arg10: memref<8x10xf32, #tpu.memory_space<vmem>>) attributes {dimension_semantics = [#tpu.dimension_semantics<parallel>], iteration_bounds = array<i64: 1>, scalar_prefetch = 0 : i64, scratch_operands = 0 : i64, tpu.core_type = #tpu.core_type<tc>, window_params = [{transform_indices = @transform_0, window_bounds = array<i64: 8, 784>}, {pipeline_mode = #tpu.pipeline_mode<synchronous>, transform_indices = @transform_1, window_bounds = array<i64: 784, 512>}, {pipeline_mode = #tpu.pipeline_mode<synchronous>, transform_indices = @transform_2, window_bounds = array<i64: 1, 512>}, {pipeline_mode = #tpu.pipeline_mode<synchronous>, transform_indices = @transform_3, window_bounds = array<i64: 512, 256>}, {pipeline_mode = #tpu.pipeline_mode<synchronous>, transform_indices = @transform_4, window_bounds = array<i64: 1, 256>}, {pipeline_mode = #tpu.pipeline_mode<synchronous>, transform_indices = @transform_5, window_bounds = array<i64: 256, 128>}, {pipeline_mode = #tpu.pipeline_mode<synchronous>, transform_indices = @transform_6, window_bounds = array<i64: 1, 128>}, {pipeline_mode = #tpu.pipeline_mode<synchronous>, transform_indices = @transform_7, window_bounds = array<i64: 128, 128>}, {pipeline_mode = #tpu.pipeline_mode<synchronous>, transform_indices = @transform_8, window_bounds = array<i64: 1, 128>}, {transform_indices = @transform_9, window_bounds = array<i64: 8, 10>}]} {
    %c0 = arith.constant 0 : index
    %c0_0 = arith.constant 0 : index
    %0 = vector.load %arg1[%c0, %c0_0] : memref<8x784xf32, #tpu.memory_space<vmem>>, vector<8x784xf32>
    %1 = arith.truncf %0 : vector<8x784xf32> to vector<8x784xbf16>
    %c0_1 = arith.constant 0 : index
    %c0_2 = arith.constant 0 : index
    %2 = vector.load %arg2[%c0_1, %c0_2] : memref<784x512xbf16, #tpu.memory_space<vmem>>, vector<784x512xbf16>
    %cst = arith.constant dense<0.000000e+00> : vector<8x512xf32>
    %3 = tpu.matmul %1, %2, %cst {dimension_numbers = #tpu.dot_dimension_numbers<[1], [0], [0], [1], [0, 0, 1, 1], [], []>} : vector<8x784xbf16>, vector<784x512xbf16>, vector<8x512xf32> -> vector<8x512xf32>
    %c0_3 = arith.constant 0 : index
    %c0_4 = arith.constant 0 : index
    %4 = vector.load %arg3[%c0_3, %c0_4] : memref<1x512xf32, #tpu.memory_space<vmem>>, vector<1x512xf32>
    %5 = vector.broadcast %4 : vector<1x512xf32> to vector<8x512xf32>
    %6 = arith.addf %3, %5 : vector<8x512xf32>
    %cst_5 = arith.constant 0.000000e+00 : f32
    %7 = vector.broadcast %cst_5 : f32 to vector<8x512xf32>
    %8 = arith.subf %7, %6 : vector<8x512xf32>
    %9 = math.exp %8 : vector<8x512xf32>
    %cst_6 = arith.constant 1.000000e+00 : f32
    %10 = vector.broadcast %cst_6 : f32 to vector<8x512xf32>
    %11 = arith.addf %10, %9 : vector<8x512xf32>
    %12 = tpu.reciprocal %11 {approx = true} : vector<8x512xf32> -> vector<8x512xf32>
    %13 = arith.truncf %12 : vector<8x512xf32> to vector<8x512xbf16>
    %c0_7 = arith.constant 0 : index
    %c0_8 = arith.constant 0 : index
    %14 = vector.load %arg4[%c0_7, %c0_8] : memref<512x256xbf16, #tpu.memory_space<vmem>>, vector<512x256xbf16>
    %cst_9 = arith.constant dense<0.000000e+00> : vector<8x256xf32>
    %15 = tpu.matmul %13, %14, %cst_9 {dimension_numbers = #tpu.dot_dimension_numbers<[1], [0], [0], [1], [0, 0, 1, 1], [], []>} : vector<8x512xbf16>, vector<512x256xbf16>, vector<8x256xf32> -> vector<8x256xf32>
    %c0_10 = arith.constant 0 : index
    %c0_11 = arith.constant 0 : index
    %16 = vector.load %arg5[%c0_10, %c0_11] : memref<1x256xf32, #tpu.memory_space<vmem>>, vector<1x256xf32>
    %17 = vector.broadcast %16 : vector<1x256xf32> to vector<8x256xf32>
    %18 = arith.addf %15, %17 : vector<8x256xf32>
    %cst_12 = arith.constant 0.000000e+00 : f32
    %19 = vector.broadcast %cst_12 : f32 to vector<8x256xf32>
    %20 = arith.subf %19, %18 : vector<8x256xf32>
    %21 = math.exp %20 : vector<8x256xf32>
    %cst_13 = arith.constant 1.000000e+00 : f32
    %22 = vector.broadcast %cst_13 : f32 to vector<8x256xf32>
    %23 = arith.addf %22, %21 : vector<8x256xf32>
    %24 = tpu.reciprocal %23 {approx = true} : vector<8x256xf32> -> vector<8x256xf32>
    %25 = arith.truncf %24 : vector<8x256xf32> to vector<8x256xbf16>
    %c0_14 = arith.constant 0 : index
    %c0_15 = arith.constant 0 : index
    %26 = vector.load %arg6[%c0_14, %c0_15] : memref<256x128xbf16, #tpu.memory_space<vmem>>, vector<256x128xbf16>
    %cst_16 = arith.constant dense<0.000000e+00> : vector<8x128xf32>
    %27 = tpu.matmul %25, %26, %cst_16 {dimension_numbers = #tpu.dot_dimension_numbers<[1], [0], [0], [1], [0, 0, 1, 1], [], []>} : vector<8x256xbf16>, vector<256x128xbf16>, vector<8x128xf32> -> vector<8x128xf32>
    %c0_17 = arith.constant 0 : index
    %c0_18 = arith.constant 0 : index
    %28 = vector.load %arg7[%c0_17, %c0_18] : memref<1x128xf32, #tpu.memory_space<vmem>>, vector<1x128xf32>
    %29 = vector.broadcast %28 : vector<1x128xf32> to vector<8x128xf32>
    %30 = arith.addf %27, %29 : vector<8x128xf32>
    %cst_19 = arith.constant 0.000000e+00 : f32
    %31 = vector.broadcast %cst_19 : f32 to vector<8x128xf32>
    %32 = arith.subf %31, %30 : vector<8x128xf32>
    %33 = math.exp %32 : vector<8x128xf32>
    %cst_20 = arith.constant 1.000000e+00 : f32
    %34 = vector.broadcast %cst_20 : f32 to vector<8x128xf32>
    %35 = arith.addf %34, %33 : vector<8x128xf32>
    %36 = tpu.reciprocal %35 {approx = true} : vector<8x128xf32> -> vector<8x128xf32>
    %37 = arith.truncf %36 : vector<8x128xf32> to vector<8x128xbf16>
    %c0_21 = arith.constant 0 : index
    %c0_22 = arith.constant 0 : index
    %38 = vector.load %arg8[%c0_21, %c0_22] : memref<128x128xbf16, #tpu.memory_space<vmem>>, vector<128x128xbf16>
    %cst_23 = arith.constant dense<0.000000e+00> : vector<8x128xf32>
    %39 = tpu.matmul %37, %38, %cst_23 {dimension_numbers = #tpu.dot_dimension_numbers<[1], [0], [0], [1], [0, 0, 1, 1], [], []>} : vector<8x128xbf16>, vector<128x128xbf16>, vector<8x128xf32> -> vector<8x128xf32>
    %c0_24 = arith.constant 0 : index
    %c0_25 = arith.constant 0 : index
    %40 = vector.load %arg9[%c0_24, %c0_25] : memref<1x128xf32, #tpu.memory_space<vmem>>, vector<1x128xf32>
    %41 = vector.broadcast %40 : vector<1x128xf32> to vector<8x128xf32>
    %42 = arith.addf %39, %41 : vector<8x128xf32>
    %43 = vector.extract_strided_slice %42 {offsets = [0, 0], sizes = [8, 10], strides = [1, 1]} : vector<8x128xf32> to vector<8x10xf32>
    %c0_26 = arith.constant 0 : index
    %c0_27 = arith.constant 0 : index
    %44 = vector.load %arg10[%c0_26, %c0_27] : memref<8x10xf32, #tpu.memory_space<vmem>>, vector<8x10xf32>
    tpu.vector_store %arg10[%c0_26, %c0_27], %43 {strides = array<i32>} : memref<8x10xf32, #tpu.memory_space<vmem>>, vector<8x10xf32>,
    return
  }
  func.func @transform_0(%arg0: i32) -> (i32, i32) {
    %c0_i32 = arith.constant 0 : i32
    %c0_i32_0 = arith.constant 0 : i32
    return %arg0, %c0_i32 : i32, i32
  }
  func.func @transform_1(%arg0: i32) -> (i32, i32) {
    %c0_i32 = arith.constant 0 : i32
    %c0_i32_0 = arith.constant 0 : i32
    %c0_i32_1 = arith.constant 0 : i32
    return %c0_i32, %c0_i32_0 : i32, i32
  }
  func.func @transform_2(%arg0: i32) -> (i32, i32) {
    %c0_i32 = arith.constant 0 : i32
    %c0_i32_0 = arith.constant 0 : i32
    %c0_i32_1 = arith.constant 0 : i32
    return %c0_i32, %c0_i32_0 : i32, i32
  }
  func.func @transform_3(%arg0: i32) -> (i32, i32) {
    %c0_i32 = arith.constant 0 : i32
    %c0_i32_0 = arith.constant 0 : i32
    %c0_i32_1 = arith.constant 0 : i32
    return %c0_i32, %c0_i32_0 : i32, i32
  }
  func.func @transform_4(%arg0: i32) -> (i32, i32) {
    %c0_i32 = arith.constant 0 : i32
    %c0_i32_0 = arith.constant 0 : i32
    %c0_i32_1 = arith.constant 0 : i32
    return %c0_i32, %c0_i32_0 : i32, i32
  }
  func.func @transform_5(%arg0: i32) -> (i32, i32) {
    %c0_i32 = arith.constant 0 : i32
    %c0_i32_0 = arith.constant 0 : i32
    %c0_i32_1 = arith.constant 0 : i32
    return %c0_i32, %c0_i32_0 : i32, i32
  }
  func.func @transform_6(%arg0: i32) -> (i32, i32) {
    %c0_i32 = arith.constant 0 : i32
    %c0_i32_0 = arith.constant 0 : i32
    %c0_i32_1 = arith.constant 0 : i32
    return %c0_i32, %c0_i32_0 : i32, i32
  }
  func.func @transform_7(%arg0: i32) -> (i32, i32) {
    %c0_i32 = arith.constant 0 : i32
    %c0_i32_0 = arith.constant 0 : i32
    %c0_i32_1 = arith.constant 0 : i32
    return %c0_i32, %c0_i32_0 : i32, i32
  }
  func.func @transform_8(%arg0: i32) -> (i32, i32) {
    %c0_i32 = arith.constant 0 : i32
    %c0_i32_0 = arith.constant 0 : i32
    %c0_i32_1 = arith.constant 0 : i32
    return %c0_i32, %c0_i32_0 : i32, i32
  }
  func.func @transform_9(%arg0: i32) -> (i32, i32) {
    %c0_i32 = arith.constant 0 : i32
    %c0_i32_0 = arith.constant 0 : i32
    return %arg0, %c0_i32 : i32, i32
  }
}

</mosaic_0001>

<llo_original>
// kernel: dbn_forward.1
$region0: #{dbn_forward.1}
  #allocation0 [shape = 'u32[]', space=smem, size = 0x4, offset = 0x4, fixed_abs, tag = 'smem constant byte address 0x4 - core index']
  #allocation1 [shape = 'u32[72,128]{1,0:T(1,128)}', space=vmem, size = 0x9000, scoped, tag = 'internal scratch']
  %s0 = inlined_call_operand.vmem [shape: f32[8,784], index: 0, kind: input, shape index: {}]
  %s1 = inlined_call_operand.hbm [shape: bf16[784,512], index: 1, kind: input, shape index: {}]
  %s2 = inlined_call_operand.vmem [shape: f32[1,512], index: 2, kind: input, shape index: {}]
  %s3 = inlined_call_operand.hbm [shape: bf16[512,256], index: 3, kind: input, shape index: {}]
  %s4 = inlined_call_operand.vmem [shape: f32[1,256], index: 4, kind: input, shape index: {}]
  %s5 = inlined_call_operand.hbm [shape: bf16[256,128], index: 5, kind: input, shape index: {}]
  %s6 = inlined_call_operand.vmem [shape: f32[1,128], index: 6, kind: input, shape index: {}]
  %s7 = inlined_call_operand.vmem [shape: bf16[128,128], index: 7, kind: input, shape index: {}]
  %s8 = inlined_call_operand.vmem [shape: f32[1,128], index: 8, kind: input, shape index: {}]
  %s9 = inlined_call_operand.vmem [shape: f32[8,10], index: 9, kind: output, shape index: {}]
  %s10 = sld [smem:[#allocation0]]
  $region58: #{dbn_forward.1} parent=0
    _
  %s12 = ssub.s32 1, %s10
  %s13 = scalar_select 0, %s12, %s10
  $region1: #{dbn_forward.1} parent=0
    #allocation2 [shape = 'u8[802816]{0}', space=vmem, size = 0xc4000, scoped, tag = 'input window, operand 1, single buffered']
    #allocation3 [shape = 's32[1]{0}', space=sflag, size = 0x4, scoped, tag = 'scoped memory for dbn_forward.1']
    #allocation4 [shape = 'u8[262144]{0}', space=vmem, size = 0x40000, scoped, tag = 'input window, operand 3, single buffered']
    #allocation5 [shape = 's32[1]{0}', space=sflag, size = 0x4, scoped, tag = 'scoped memory for dbn_forward.1']
    #allocation6 [shape = 'u8[65536]{0}', space=vmem, size = 0x10000, scoped, tag = 'input window, operand 5, single buffered']
    %14 = vsyncpa [#allocation3], 0
    %15 = vsyncpa [#allocation5], 0
    // Predicated region
    $region2: #{dbn_forward.1} parent=1 // pred_check
      _
    $region3: #{dbn_forward.1} parent=1 // pred_check_branch
      %17 = sbr.rel (0) target = $region5
    $region4: #{dbn_forward.1} parent=1 // pred_region
      _
    $region5: #{dbn_forward.1} parent=1 // pred_fallthru
      _
    // Predicated region
    $region6: #{dbn_forward.1} parent=1 // pred_check
      _
    $region7: #{dbn_forward.1} parent=1 // pred_check_branch
      %19 = sbr.rel (0) target = $region9
    $region8: #{dbn_forward.1} parent=1 // pred_region
      %21 = vsyncadd [#allocation3], 0
      %s22 = sshll.u32 %s1, 4
      %s23 = int_to_ptr.hbm [resolvable:$true] %s22
      %s24 = sshll.u32 [#allocation2], 4
      %s25 = int_to_ptr.vmem [resolvable:$true] %s24
      %30 = dma.hbm_to_vmem [thread:$0]  %s23, 25088, %s25, [#allocation3], 256, 256, 16
    $region9: #{dbn_forward.1} parent=1 // pred_fallthru
      _
    // Predicated region
    $region10: #{dbn_forward.1} parent=1 // pred_check
      _
    $region11: #{dbn_forward.1} parent=1 // pred_check_branch
      %32 = sbr.rel (0) target = $region13
    $region12: #{dbn_forward.1} parent=1 // pred_region
      _
    $region13: #{dbn_forward.1} parent=1 // pred_fallthru
      _
    // Predicated region
    $region14: #{dbn_forward.1} parent=1 // pred_check
      _
    $region15: #{dbn_forward.1} parent=1 // pred_check_branch
      %34 = sbr.rel (0) target = $region17
    $region16: #{dbn_forward.1} parent=1 // pred_region
      %36 = vsyncadd [#allocation5], 0
      %s37 = sshll.u32 %s3, 4
      %s38 = int_to_ptr.hbm [resolvable:$true] %s37
      %s39 = sshll.u32 [#allocation4], 4
      %s40 = int_to_ptr.vmem [resolvable:$true] %s39
      %45 = dma.hbm_to_vmem [thread:$0]  %s38, 8192, %s40, [#allocation5], 128, 128, 8
    $region17: #{dbn_forward.1} parent=1 // pred_fallthru
      _
    // Predicated region
    $region18: #{dbn_forward.1} parent=1 // pred_check
      _
    $region19: #{dbn_forward.1} parent=1 // pred_check_branch
      %47 = sbr.rel (0) target = $region21
    $region20: #{dbn_forward.1} parent=1 // pred_region
      _
    $region21: #{dbn_forward.1} parent=1 // pred_fallthru
      _
    // Predicated region
    $region22: #{dbn_forward.1} parent=1 // pred_check
      _
    $region23: #{dbn_forward.1} parent=1 // pred_check_branch
      %49 = sbr.rel (0) target = $region25
    $region24: #{dbn_forward.1} parent=1 // pred_region
      %51 = vsyncadd [#allocation5], 0
      %s52 = sshll.u32 %s5, 4
      %s53 = int_to_ptr.hbm [resolvable:$true] %s52
      %s54 = sshll.u32 [#allocation6], 4
      %s55 = int_to_ptr.vmem [resolvable:$true] %s54
      %60 = dma.hbm_to_vmem [thread:$0]  %s53, 2048, %s55, [#allocation5], 64, 64, 4
    $region25: #{dbn_forward.1} parent=1 // pred_fallthru
      _
    // Predicated region
    $region26: #{dbn_forward.1} parent=1 // pred_check
      _
    $region27: #{dbn_forward.1} parent=1 // pred_check_branch
      %62 = sbr.rel (0) target = $region29
    $region28: #{dbn_forward.1} parent=1 // pred_region
      _
    $region29: #{dbn_forward.1} parent=1 // pred_fallthru
      _
    // Predicated region
    $region30: #{dbn_forward.1} parent=1 // pred_check
      _
    $region31: #{dbn_forward.1} parent=1 // pred_check_branch
      %64 = sbr.rel (0) target = $region33
    $region32: #{dbn_forward.1} parent=1 // pred_region
      _
    $region33: #{dbn_forward.1} parent=1 // pred_fallthru
      _
    // Predicated region
    $region34: #{dbn_forward.1} parent=1 // pred_check
      _
    $region35: #{dbn_forward.1} parent=1 // pred_check_branch
      %66 = sbr.rel (0) target = $region37
    $region36: #{dbn_forward.1} parent=1 // pred_region
      _
    $region37: #{dbn_forward.1} parent=1 // pred_fallthru
      _
    // Predicated region
    $region38: #{dbn_forward.1} parent=1 // pred_check
      _
    $region39: #{dbn_forward.1} parent=1 // pred_check_branch
      %68 = sbr.rel (0) target = $region41
    $region40: #{dbn_forward.1} parent=1 // pred_region
      %70 = dma.done [#allocation3], 25088
    $region41: #{dbn_forward.1} parent=1 // pred_fallthru
      _
    // Predicated region
    $region42: #{dbn_forward.1} parent=1 // pred_check
      _
    $region43: #{dbn_forward.1} parent=1 // pred_check_branch
      %72 = sbr.rel (0) target = $region45
    $region44: #{dbn_forward.1} parent=1 // pred_region
      %74 = dma.done [#allocation5], 8192
    $region45: #{dbn_forward.1} parent=1 // pred_fallthru
      _
    // Predicated region
    $region46: #{dbn_forward.1} parent=1 // pred_check
      _
    $region47: #{dbn_forward.1} parent=1 // pred_check_branch
      %76 = sbr.rel (0) target = $region49
    $region48: #{dbn_forward.1} parent=1 // pred_region
      %78 = dma.done [#allocation5], 2048
    $region49: #{dbn_forward.1} parent=1 // pred_fallthru
      _
    %v80 = vld [vmem:[%s0] sm:$0xff]
    %v81 = vld [vmem:[%s0 + $0x8] sm:$0xff]
    %v82 = vld [vmem:[%s0 + $0x10] sm:$0xff]
    %v83 = vld [vmem:[%s0 + $0x18] sm:$0xff]
    %v84 = vld [vmem:[%s0 + $0x20] sm:$0xff]
    %v85 = vld [vmem:[%s0 + $0x28] sm:$0xff]
    %v86 = vld [vmem:[%s0 + $0x30] sm:$0xff]
    %v87 = vpack.c.bf16 %v80, %v80
    %v88 = vpack.c.bf16 %v81, %v81
    %v89 = vpack.c.bf16 %v82, %v82
    %v90 = vpack.c.bf16 %v83, %v83
    %v91 = vpack.c.bf16 %v84, %v84
    %v92 = vpack.c.bf16 %v85, %v85
    %v93 = vpack.c.bf16 %v86, %v86
    %v94 = vld [vmem:[#allocation2] sm:$0xff]
    %v95 = vld [vmem:[#allocation2 + $0x8] sm:$0xff]
    %v96 = vld [vmem:[#allocation2 + $0x10] sm:$0xff]
    %v97 = vld [vmem:[#allocation2 + $0x18] sm:$0xff]
    %v98 = vld [vmem:[#allocation2 + $0x20] sm:$0xff]
    %v99 = vld [vmem:[#allocation2 + $0x28] sm:$0xff]
    %v100 = vld [vmem:[#allocation2 + $0x30] sm:$0xff]
    %v101 = vld [vmem:[#allocation2 + $0x38] sm:$0xff]
    %v102 = vld [vmem:[#allocation2 + $0x40] sm:$0xff]
    %v103 = vld [vmem:[#allocation2 + $0x48] sm:$0xff]
    %v104 = vld [vmem:[#allocation2 + $0x50] sm:$0xff]
    %v105 = vld [vmem:[#allocation2 + $0x58] sm:$0xff]
    %v106 = vld [vmem:[#allocation2 + $0x60] sm:$0xff]
    %v107 = vld [vmem:[#allocation2 + $0x68] sm:$0xff]
    %v108 = vld [vmem:[#allocation2 + $0x70] sm:$0xff]
    %v109 = vld [vmem:[#allocation2 + $0x78] sm:$0xff]
    %v110 = vld [vmem:[#allocation2 + $0x80] sm:$0xff]
    %v111 = vld [vmem:[#allocation2 + $0x88] sm:$0xff]
    %v112 = vld [vmem:[#allocation2 + $0x90] sm:$0xff]
    %v113 = vld [vmem:[#allocation2 + $0x98] sm:$0xff]
    %v114 = vld [vmem:[#allocation2 + $0xa0] sm:$0xff]
    %v115 = vld [vmem:[#allocation2 + $0xa8] sm:$0xff]
    %v116 = vld [vmem:[#allocation2 + $0xb0] sm:$0xff]
    %v117 = vld [vmem:[#allocation2 + $0xb8] sm:$0xff]
    %v118 = vld [vmem:[#allocation2 + $0xc0] sm:$0xff]
    %v119 = vld [vmem:[#allocation2 + $0xc8] sm:$0xff]
    %v120 = vld [vmem:[#allocation2 + $0xd0] sm:$0xff]
    %v121 = vld [vmem:[#allocation2 + $0xd8] sm:$0xff]
    %v122 = vld [vmem:[#allocation2 + $0xe0] sm:$0xff]
    %v123 = vld [vmem:[#allocation2 + $0xe8] sm:$0xff]
    %v124 = vld [vmem:[#allocation2 + $0xf0] sm:$0xff]
    %v125 = vld [vmem:[#allocation2 + $0xf8] sm:$0xff]
    %v126 = vld [vmem:[#allocation2 + $0x100] sm:$0xff]
    %v127 = vld [vmem:[#allocation2 + $0x108] sm:$0xff]
    %v128 = vld [vmem:[#allocation2 + $0x110] sm:$0xff]
    %v129 = vld [vmem:[#allocation2 + $0x118] sm:$0xff]
    %v130 = vld [vmem:[#allocation2 + $0x120] sm:$0xff]
    %v131 = vld [vmem:[#allocation2 + $0x128] sm:$0xff]
    %v132 = vld [vmem:[#allocation2 + $0x130] sm:$0xff]
    %v133 = vld [vmem:[#allocation2 + $0x138] sm:$0xff]
    %v134 = vld [vmem:[#allocation2 + $0x140] sm:$0xff]
    %v135 = vld [vmem:[#allocation2 + $0x148] sm:$0xff]
    %v136 = vld [vmem:[#allocation2 + $0x150] sm:$0xff]
    %v137 = vld [vmem:[#allocation2 + $0x158] sm:$0xff]
    %v138 = vld [vmem:[#allocation2 + $0x160] sm:$0xff]
    %v139 = vld [vmem:[#allocation2 + $0x168] sm:$0xff]
    %v140 = vld [vmem:[#allocation2 + $0x170] sm:$0xff]
    %v141 = vld [vmem:[#allocation2 + $0x178] sm:$0xff]
    %v142 = vld [vmem:[#allocation2 + $0x180] sm:$0xff]
    %v143 = vld [vmem:[#allocation2 + $0x188] sm:$0xff]
    %v144 = vld [vmem:[#allocation2 + $0x190] sm:$0xff]
    %v145 = vld [vmem:[#allocation2 + $0x198] sm:$0xff]
    %v146 = vld [vmem:[#allocation2 + $0x1a0] sm:$0xff]
    %v147 = vld [vmem:[#allocation2 + $0x1a8] sm:$0xff]
    %v148 = vld [vmem:[#allocation2 + $0x1b0] sm:$0xff]
    %v149 = vld [vmem:[#allocation2 + $0x1b8] sm:$0xff]
    %v150 = vld [vmem:[#allocation2 + $0x1c0] sm:$0xff]
    %v151 = vld [vmem:[#allocation2 + $0x1c8] sm:$0xff]
    %v152 = vld [vmem:[#allocation2 + $0x1d0] sm:$0xff]
    %v153 = vld [vmem:[#allocation2 + $0x1d8] sm:$0xff]
    %v154 = vld [vmem:[#allocation2 + $0x1e0] sm:$0xff]
    %v155 = vld [vmem:[#allocation2 + $0x1e8] sm:$0xff]
    %v156 = vld [vmem:[#allocation2 + $0x1f0] sm:$0xff]
    %v157 = vld [vmem:[#allocation2 + $0x1f8] sm:$0xff]
    %v158 = vld [vmem:[#allocation2 + $0x200] sm:$0xff]
    %v159 = vld [vmem:[#allocation2 + $0x208] sm:$0xff]
    %v160 = vld [vmem:[#allocation2 + $0x210] sm:$0xff]
    %v161 = vld [vmem:[#allocation2 + $0x218] sm:$0xff]
    %v162 = vld [vmem:[#allocation2 + $0x220] sm:$0xff]
    %v163 = vld [vmem:[#allocation2 + $0x228] sm:$0xff]
    %v164 = vld [vmem:[#allocation2 + $0x230] sm:$0xff]
    %v165 = vld [vmem:[#allocation2 + $0x238] sm:$0xff]
    %v166 = vld [vmem:[#allocation2 + $0x240] sm:$0xff]
    %v167 = vld [vmem:[#allocation2 + $0x248] sm:$0xff]
    %v168 = vld [vmem:[#allocation2 + $0x250] sm:$0xff]
    %v169 = vld [vmem:[#allocation2 + $0x258] sm:$0xff]
    %v170 = vld [vmem:[#allocation2 + $0x260] sm:$0xff]
    %v171 = vld [vmem:[#allocation2 + $0x268] sm:$0xff]
    %v172 = vld [vmem:[#allocation2 + $0x270] sm:$0xff]
    %v173 = vld [vmem:[#allocation2 + $0x278] sm:$0xff]
    %v174 = vld [vmem:[#allocation2 + $0x280] sm:$0xff]
    %v175 = vld [vmem:[#allocation2 + $0x288] sm:$0xff]
    %v176 = vld [vmem:[#allocation2 + $0x290] sm:$0xff]
    %v177 = vld [vmem:[#allocation2 + $0x298] sm:$0xff]
    %v178 = vld [vmem:[#allocation2 + $0x2a0] sm:$0xff]
    %v179 = vld [vmem:[#allocation2 + $0x2a8] sm:$0xff]
    %v180 = vld [vmem:[#allocation2 + $0x2b0] sm:$0xff]
    %v181 = vld [vmem:[#allocation2 + $0x2b8] sm:$0xff]
    %v182 = vld [vmem:[#allocation2 + $0x2c0] sm:$0xff]
    %v183 = vld [vmem:[#allocation2 + $0x2c8] sm:$0xff]
    %v184 = vld [vmem:[#allocation2 + $0x2d0] sm:$0xff]
    %v185 = vld [vmem:[#allocation2 + $0x2d8] sm:$0xff]
    %v186 = vld [vmem:[#allocation2 + $0x2e0] sm:$0xff]
    %v187 = vld [vmem:[#allocation2 + $0x2e8] sm:$0xff]
    %v188 = vld [vmem:[#allocation2 + $0x2f0] sm:$0xff]
    %v189 = vld [vmem:[#allocation2 + $0x2f8] sm:$0xff]
    %v190 = vld [vmem:[#allocation2 + $0x300] sm:$0xff]
    %v191 = vld [vmem:[#allocation2 + $0x308] sm:$0xff]
    %v192 = vld [vmem:[#allocation2 + $0x310] sm:$0xff]
    %v193 = vld [vmem:[#allocation2 + $0x318] sm:$0xff]
    %v194 = vld [vmem:[#allocation2 + $0x320] sm:$0xff]
    %v195 = vld [vmem:[#allocation2 + $0x328] sm:$0xff]
    %v196 = vld [vmem:[#allocation2 + $0x330] sm:$0xff]
    %v197 = vld [vmem:[#allocation2 + $0x338] sm:$0xff]
    %v198 = vld [vmem:[#allocation2 + $0x340] sm:$0xff]
    %v199 = vld [vmem:[#allocation2 + $0x348] sm:$0xff]
    %v200 = vld [vmem:[#allocation2 + $0x350] sm:$0xff]
    %v201 = vld [vmem:[#allocation2 + $0x358] sm:$0xff]
    %v202 = vld [vmem:[#allocation2 + $0x360] sm:$0xff]
    %v203 = vld [vmem:[#allocation2 + $0x368] sm:$0xff]
    %v204 = vld [vmem:[#allocation2 + $0x370] sm:$0xff]
    %v205 = vld [vmem:[#allocation2 + $0x378] sm:$0xff]
    %v206 = vld [vmem:[#allocation2 + $0x380] sm:$0xff]
    %v207 = vld [vmem:[#allocation2 + $0x388] sm:$0xff]
    %v208 = vld [vmem:[#allocation2 + $0x390] sm:$0xff]
    %v209 = vld [vmem:[#allocation2 + $0x398] sm:$0xff]
    %v210 = vld [vmem:[#allocation2 + $0x3a0] sm:$0xff]
    %v211 = vld [vmem:[#allocation2 + $0x3a8] sm:$0xff]
    %v212 = vld [vmem:[#allocation2 + $0x3b0] sm:$0xff]
    %v213 = vld [vmem:[#allocation2 + $0x3b8] sm:$0xff]
    %v214 = vld [vmem:[#allocation2 + $0x3c0] sm:$0xff]
    %v215 = vld [vmem:[#allocation2 + $0x3c8] sm:$0xff]
    %v216 = vld [vmem:[#allocation2 + $0x3d0] sm:$0xff]
    %v217 = vld [vmem:[#allocation2 + $0x3d8] sm:$0xff]
    %v218 = vld [vmem:[#allocation2 + $0x3e0] sm:$0xff]
    %v219 = vld [vmem:[#allocation2 + $0x3e8] sm:$0xff]
    %v220 = vld [vmem:[#allocation2 + $0x3f0] sm:$0xff]
    %v221 = vld [vmem:[#allocation2 + $0x3f8] sm:$0xff]
    %v222 = vld [vmem:[#allocation2 + $0x400] sm:$0xff]
    %v223 = vld [vmem:[#allocation2 + $0x408] sm:$0xff]
    %v224 = vld [vmem:[#allocation2 + $0x410] sm:$0xff]
    %v225 = vld [vmem:[#allocation2 + $0x418] sm:$0xff]
    %v226 = vld [vmem:[#allocation2 + $0x420] sm:$0xff]
    %v227 = vld [vmem:[#allocation2 + $0x428] sm:$0xff]
    %v228 = vld [vmem:[#allocation2 + $0x430] sm:$0xff]
    %v229 = vld [vmem:[#allocation2 + $0x438] sm:$0xff]
    %v230 = vld [vmem:[#allocation2 + $0x440] sm:$0xff]
    %v231 = vld [vmem:[#allocation2 + $0x448] sm:$0xff]
    %v232 = vld [vmem:[#allocation2 + $0x450] sm:$0xff]
    %v233 = vld [vmem:[#allocation2 + $0x458] sm:$0xff]
    %v234 = vld [vmem:[#allocation2 + $0x460] sm:$0xff]
    %v235 = vld [vmem:[#allocation2 + $0x468] sm:$0xff]
    %v236 = vld [vmem:[#allocation2 + $0x470] sm:$0xff]
    %v237 = vld [vmem:[#allocation2 + $0x478] sm:$0xff]
    %v238 = vld [vmem:[#allocation2 + $0x480] sm:$0xff]
    %v239 = vld [vmem:[#allocation2 + $0x488] sm:$0xff]
    %v240 = vld [vmem:[#allocation2 + $0x490] sm:$0xff]
    %v241 = vld [vmem:[#allocation2 + $0x498] sm:$0xff]
    %v242 = vld [vmem:[#allocation2 + $0x4a0] sm:$0xff]
    %v243 = vld [vmem:[#allocation2 + $0x4a8] sm:$0xff]
    %v244 = vld [vmem:[#allocation2 + $0x4b0] sm:$0xff]
    %v245 = vld [vmem:[#allocation2 + $0x4b8] sm:$0xff]
    %v246 = vld [vmem:[#allocation2 + $0x4c0] sm:$0xff]
    %v247 = vld [vmem:[#allocation2 + $0x4c8] sm:$0xff]
    %v248 = vld [vmem:[#allocation2 + $0x4d0] sm:$0xff]
    %v249 = vld [vmem:[#allocation2 + $0x4d8] sm:$0xff]
    %v250 = vld [vmem:[#allocation2 + $0x4e0] sm:$0xff]
    %v251 = vld [vmem:[#allocation2 + $0x4e8] sm:$0xff]
    %v252 = vld [vmem:[#allocation2 + $0x4f0] sm:$0xff]
    %v253 = vld [vmem:[#allocation2 + $0x4f8] sm:$0xff]
    %v254 = vld [vmem:[#allocation2 + $0x500] sm:$0xff]
    %v255 = vld [vmem:[#allocation2 + $0x508] sm:$0xff]
    %v256 = vld [vmem:[#allocation2 + $0x510] sm:$0xff]
    %v257 = vld [vmem:[#allocation2 + $0x518] sm:$0xff]
    %v258 = vld [vmem:[#allocation2 + $0x520] sm:$0xff]
    %v259 = vld [vmem:[#allocation2 + $0x528] sm:$0xff]
    %v260 = vld [vmem:[#allocation2 + $0x530] sm:$0xff]
    %v261 = vld [vmem:[#allocation2 + $0x538] sm:$0xff]
    %v262 = vld [vmem:[#allocation2 + $0x540] sm:$0xff]
    %v263 = vld [vmem:[#allocation2 + $0x548] sm:$0xff]
    %v264 = vld [vmem:[#allocation2 + $0x550] sm:$0xff]
    %v265 = vld [vmem:[#allocation2 + $0x558] sm:$0xff]
    %v266 = vld [vmem:[#allocation2 + $0x560] sm:$0xff]
    %v267 = vld [vmem:[#allocation2 + $0x568] sm:$0xff]
    %v268 = vld [vmem:[#allocation2 + $0x570] sm:$0xff]
    %v269 = vld [vmem:[#allocation2 + $0x578] sm:$0xff]
    %v270 = vld [vmem:[#allocation2 + $0x580] sm:$0xff]
    %v271 = vld [vmem:[#allocation2 + $0x588] sm:$0xff]
    %v272 = vld [vmem:[#allocation2 + $0x590] sm:$0xff]
    %v273 = vld [vmem:[#allocation2 + $0x598] sm:$0xff]
    %v274 = vld [vmem:[#allocation2 + $0x5a0] sm:$0xff]
    %v275 = vld [vmem:[#allocation2 + $0x5a8] sm:$0xff]
    %v276 = vld [vmem:[#allocation2 + $0x5b0] sm:$0xff]
    %v277 = vld [vmem:[#allocation2 + $0x5b8] sm:$0xff]
    %v278 = vld [vmem:[#allocation2 + $0x5c0] sm:$0xff]
    %v279 = vld [vmem:[#allocation2 + $0x5c8] sm:$0xff]
    %v280 = vld [vmem:[#allocation2 + $0x5d0] sm:$0xff]
    %v281 = vld [vmem:[#allocation2 + $0x5d8] sm:$0xff]
    %v282 = vld [vmem:[#allocation2 + $0x5e0] sm:$0xff]
    %v283 = vld [vmem:[#allocation2 + $0x5e8] sm:$0xff]
    %v284 = vld [vmem:[#allocation2 + $0x5f0] sm:$0xff]
    %v285 = vld [vmem:[#allocation2 + $0x5f8] sm:$0xff]
    %v286 = vld [vmem:[#allocation2 + $0x600] sm:$0xff]
    %v287 = vld [vmem:[#allocation2 + $0x608] sm:$0xff]
    %v288 = vld [vmem:[#allocation2 + $0x610] sm:$0xff]
    %v289 = vld [vmem:[#allocation2 + $0x618] sm:$0xff]
    %v290 = vld [vmem:[%s2] sm:$0xf]
    %v292 = vperm.slane %v290, 0
    %v293 = vperm.slane %v290, 1
    %v294 = vperm.slane %v290, 2
    %v295 = vperm.slane %v290, 3
    %v496 = vunpack.c.l.b16 %v94
    %v497 = vunpack.c.h.b16 %v94
    %v498 = vunpack.c.l.b16 %v95
    %v499 = vunpack.c.h.b16 %v95
    %v500 = vunpack.c.l.b16 %v96
    %v501 = vunpack.c.h.b16 %v96
    %v502 = vunpack.c.l.b16 %v97
    %v503 = vunpack.c.h.b16 %v97
    %v504 = vunpack.c.l.b16 %v98
    %v505 = vunpack.c.h.b16 %v98
    %v506 = vunpack.c.l.b16 %v99
    %v507 = vunpack.c.h.b16 %v99
    %v508 = vunpack.c.l.b16 %v100
    %v509 = vunpack.c.h.b16 %v100
    %v510 = vunpack.c.l.b16 %v101
    %v511 = vunpack.c.h.b16 %v101
    %v512 = vunpack.c.l.b16 %v102
    %v513 = vunpack.c.h.b16 %v102
    %v514 = vunpack.c.l.b16 %v103
    %v515 = vunpack.c.h.b16 %v103
    %v516 = vunpack.c.l.b16 %v104
    %v517 = vunpack.c.h.b16 %v104
    %v518 = vunpack.c.l.b16 %v105
    %v519 = vunpack.c.h.b16 %v105
    %v520 = vunpack.c.l.b16 %v106
    %v521 = vunpack.c.h.b16 %v106
    %v522 = vunpack.c.l.b16 %v107
    %v523 = vunpack.c.h.b16 %v107
    %v524 = vunpack.c.l.b16 %v108
    %v525 = vunpack.c.h.b16 %v108
    %v526 = vunpack.c.l.b16 %v109
    %v527 = vunpack.c.h.b16 %v109
    %v528 = vunpack.c.l.b16 %v110
    %v529 = vunpack.c.h.b16 %v110
    %v530 = vunpack.c.l.b16 %v111
    %v531 = vunpack.c.h.b16 %v111
    %v532 = vunpack.c.l.b16 %v112
    %v533 = vunpack.c.h.b16 %v112
    %v534 = vunpack.c.l.b16 %v113
    %v535 = vunpack.c.h.b16 %v113
    %v536 = vunpack.c.l.b16 %v114
    %v537 = vunpack.c.h.b16 %v114
    %v538 = vunpack.c.l.b16 %v115
    %v539 = vunpack.c.h.b16 %v115
    %v540 = vunpack.c.l.b16 %v116
    %v541 = vunpack.c.h.b16 %v116
    %v542 = vunpack.c.l.b16 %v117
    %v543 = vunpack.c.h.b16 %v117
    %v544 = vunpack.c.l.b16 %v118
    %v545 = vunpack.c.h.b16 %v118
    %v546 = vunpack.c.l.b16 %v119
    %v547 = vunpack.c.h.b16 %v119
    %v548 = vunpack.c.l.b16 %v120
    %v549 = vunpack.c.h.b16 %v120
    %v550 = vunpack.c.l.b16 %v121
    %v551 = vunpack.c.h.b16 %v121
    %v552 = vunpack.c.l.b16 %v122
    %v553 = vunpack.c.h.b16 %v122
    %v554 = vunpack.c.l.b16 %v123
    %v555 = vunpack.c.h.b16 %v123
    %v556 = vunpack.c.l.b16 %v124
    %v557 = vunpack.c.h.b16 %v124
    %v558 = vunpack.c.l.b16 %v125
    %v559 = vunpack.c.h.b16 %v125
    %v560 = vunpack.c.l.b16 %v126
    %v561 = vunpack.c.h.b16 %v126
    %v562 = vunpack.c.l.b16 %v127
    %v563 = vunpack.c.h.b16 %v127
    %v564 = vunpack.c.l.b16 %v128
    %v565 = vunpack.c.h.b16 %v128
    %v566 = vunpack.c.l.b16 %v129
    %v567 = vunpack.c.h.b16 %v129
    %v568 = vunpack.c.l.b16 %v130
    %v569 = vunpack.c.h.b16 %v130
    %v570 = vunpack.c.l.b16 %v131
    %v571 = vunpack.c.h.b16 %v131
    %v572 = vunpack.c.l.b16 %v132
    %v573 = vunpack.c.h.b16 %v132
    %v574 = vunpack.c.l.b16 %v133
    %v575 = vunpack.c.h.b16 %v133
    %v576 = vunpack.c.l.b16 %v134
    %v577 = vunpack.c.h.b16 %v134
    %v578 = vunpack.c.l.b16 %v135
    %v579 = vunpack.c.h.b16 %v135
    %v580 = vunpack.c.l.b16 %v136
    %v581 = vunpack.c.h.b16 %v136
    %v582 = vunpack.c.l.b16 %v137
    %v583 = vunpack.c.h.b16 %v137
    %v584 = vunpack.c.l.b16 %v138
    %v585 = vunpack.c.h.b16 %v138
    %v586 = vunpack.c.l.b16 %v139
    %v587 = vunpack.c.h.b16 %v139
    %v588 = vunpack.c.l.b16 %v140
    %v589 = vunpack.c.h.b16 %v140
    %v590 = vunpack.c.l.b16 %v141
    %v591 = vunpack.c.h.b16 %v141
    %v592 = vunpack.c.l.b16 %v142
    %v593 = vunpack.c.h.b16 %v142
    %v594 = vunpack.c.l.b16 %v143
    %v595 = vunpack.c.h.b16 %v143
    %v596 = vunpack.c.l.b16 %v144
    %v597 = vunpack.c.h.b16 %v144
    %v598 = vunpack.c.l.b16 %v145
    %v599 = vunpack.c.h.b16 %v145
    %v600 = vunpack.c.l.b16 %v146
    %v601 = vunpack.c.h.b16 %v146
    %v602 = vunpack.c.l.b16 %v147
    %v603 = vunpack.c.h.b16 %v147
    %v604 = vunpack.c.l.b16 %v148
    %v605 = vunpack.c.h.b16 %v148
    %v606 = vunpack.c.l.b16 %v149
    %v607 = vunpack.c.h.b16 %v149
    %v608 = vunpack.c.l.b16 %v150
    %v609 = vunpack.c.h.b16 %v150
    %v610 = vunpack.c.l.b16 %v151
    %v611 = vunpack.c.h.b16 %v151
    %v612 = vunpack.c.l.b16 %v152
    %v613 = vunpack.c.h.b16 %v152
    %v614 = vunpack.c.l.b16 %v153
    %v615 = vunpack.c.h.b16 %v153
    %v616 = vunpack.c.l.b16 %v154
    %v617 = vunpack.c.h.b16 %v154
    %v618 = vunpack.c.l.b16 %v155
    %v619 = vunpack.c.h.b16 %v155
    %v620 = vunpack.c.l.b16 %v156
    %v621 = vunpack.c.h.b16 %v156
    %v622 = vunpack.c.l.b16 %v157
    %v623 = vunpack.c.h.b16 %v157
    %v624 = vunpack.c.l.b16 %v158
    %v625 = vunpack.c.h.b16 %v158
    %v626 = vunpack.c.l.b16 %v159
    %v627 = vunpack.c.h.b16 %v159
    %v628 = vunpack.c.l.b16 %v160
    %v629 = vunpack.c.h.b16 %v160
    %v630 = vunpack.c.l.b16 %v161
    %v631 = vunpack.c.h.b16 %v161
    %v632 = vunpack.c.l.b16 %v162
    %v633 = vunpack.c.h.b16 %v162
    %v634 = vunpack.c.l.b16 %v163
    %v635 = vunpack.c.h.b16 %v163
    %v636 = vunpack.c.l.b16 %v164
    %v637 = vunpack.c.h.b16 %v164
    %v638 = vunpack.c.l.b16 %v165
    %v639 = vunpack.c.h.b16 %v165
    %v640 = vunpack.c.l.b16 %v166
    %v641 = vunpack.c.h.b16 %v166
    %v642 = vunpack.c.l.b16 %v167
    %v643 = vunpack.c.h.b16 %v167
    %v644 = vunpack.c.l.b16 %v168
    %v645 = vunpack.c.h.b16 %v168
    %v646 = vunpack.c.l.b16 %v169
    %v647 = vunpack.c.h.b16 %v169
    %v648 = vunpack.c.l.b16 %v170
    %v649 = vunpack.c.h.b16 %v170
    %v650 = vunpack.c.l.b16 %v171
    %v651 = vunpack.c.h.b16 %v171
    %v652 = vunpack.c.l.b16 %v172
    %v653 = vunpack.c.h.b16 %v172
    %v654 = vunpack.c.l.b16 %v173
    %v655 = vunpack.c.h.b16 %v173
    %v656 = vunpack.c.l.b16 %v174
    %v657 = vunpack.c.h.b16 %v174
    %v658 = vunpack.c.l.b16 %v175
    %v659 = vunpack.c.h.b16 %v175
    %v660 = vunpack.c.l.b16 %v176
    %v661 = vunpack.c.h.b16 %v176
    %v662 = vunpack.c.l.b16 %v177
    %v663 = vunpack.c.h.b16 %v177
    %v664 = vunpack.c.l.b16 %v178
    %v665 = vunpack.c.h.b16 %v178
    %v666 = vunpack.c.l.b16 %v179
    %v667 = vunpack.c.h.b16 %v179
    %v668 = vunpack.c.l.b16 %v180
    %v669 = vunpack.c.h.b16 %v180
    %v670 = vunpack.c.l.b16 %v181
    %v671 = vunpack.c.h.b16 %v181
    %v672 = vunpack.c.l.b16 %v182
    %v673 = vunpack.c.h.b16 %v182
    %v674 = vunpack.c.l.b16 %v183
    %v675 = vunpack.c.h.b16 %v183
    %v676 = vunpack.c.l.b16 %v184
    %v677 = vunpack.c.h.b16 %v184
    %v678 = vunpack.c.l.b16 %v185
    %v679 = vunpack.c.h.b16 %v185
    %v680 = vunpack.c.l.b16 %v186
    %v681 = vunpack.c.h.b16 %v186
    %v682 = vunpack.c.l.b16 %v187
    %v683 = vunpack.c.h.b16 %v187
    %v684 = vunpack.c.l.b16 %v188
    %v685 = vunpack.c.h.b16 %v188
    %v686 = vunpack.c.l.b16 %v189
    %v687 = vunpack.c.h.b16 %v189
    %v688 = vunpack.c.l.b16 %v190
    %v689 = vunpack.c.h.b16 %v190
    %v690 = vunpack.c.l.b16 %v191
    %v691 = vunpack.c.h.b16 %v191
    %v692 = vunpack.c.l.b16 %v192
    %v693 = vunpack.c.h.b16 %v192
    %v694 = vunpack.c.l.b16 %v193
    %v695 = vunpack.c.h.b16 %v193
    %v696 = vunpack.c.l.b16 %v194
    %v697 = vunpack.c.h.b16 %v194
    %v698 = vunpack.c.l.b16 %v195
    %v699 = vunpack.c.h.b16 %v195
    %v700 = vunpack.c.l.b16 %v196
    %v701 = vunpack.c.h.b16 %v196
    %v702 = vunpack.c.l.b16 %v197
    %v703 = vunpack.c.h.b16 %v197
    %v704 = vunpack.c.l.b16 %v198
    %v705 = vunpack.c.h.b16 %v198
    %v706 = vunpack.c.l.b16 %v199
    %v707 = vunpack.c.h.b16 %v199
    %v708 = vunpack.c.l.b16 %v200
    %v709 = vunpack.c.h.b16 %v200
    %v710 = vunpack.c.l.b16 %v201
    %v711 = vunpack.c.h.b16 %v201
    %v712 = vunpack.c.l.b16 %v202
    %v713 = vunpack.c.h.b16 %v202
    %v714 = vunpack.c.l.b16 %v203
    %v715 = vunpack.c.h.b16 %v203
    %v716 = vunpack.c.l.b16 %v204
    %v717 = vunpack.c.h.b16 %v204
    %v718 = vunpack.c.l.b16 %v205
    %v719 = vunpack.c.h.b16 %v205
    %v720 = vunpack.c.l.b16 %v206
    %v721 = vunpack.c.h.b16 %v206
    %v722 = vunpack.c.l.b16 %v207
    %v723 = vunpack.c.h.b16 %v207
    %v724 = vunpack.c.l.b16 %v208
    %v725 = vunpack.c.h.b16 %v208
    %v726 = vunpack.c.l.b16 %v209
    %v727 = vunpack.c.h.b16 %v209
    %v728 = vunpack.c.l.b16 %v210
    %v729 = vunpack.c.h.b16 %v210
    %v730 = vunpack.c.l.b16 %v211
    %v731 = vunpack.c.h.b16 %v211
    %v732 = vunpack.c.l.b16 %v212
    %v733 = vunpack.c.h.b16 %v212
    %v734 = vunpack.c.l.b16 %v213
    %v735 = vunpack.c.h.b16 %v213
    %v736 = vunpack.c.l.b16 %v214
    %v737 = vunpack.c.h.b16 %v214
    %v738 = vunpack.c.l.b16 %v215
    %v739 = vunpack.c.h.b16 %v215
    %v740 = vunpack.c.l.b16 %v216
    %v741 = vunpack.c.h.b16 %v216
    %v742 = vunpack.c.l.b16 %v217
    %v743 = vunpack.c.h.b16 %v217
    %v744 = vunpack.c.l.b16 %v218
    %v745 = vunpack.c.h.b16 %v218
    %v746 = vunpack.c.l.b16 %v219
    %v747 = vunpack.c.h.b16 %v219
    %v748 = vunpack.c.l.b16 %v220
    %v749 = vunpack.c.h.b16 %v220
    %v750 = vunpack.c.l.b16 %v221
    %v751 = vunpack.c.h.b16 %v221
    %v752 = vunpack.c.l.b16 %v222
    %v753 = vunpack.c.h.b16 %v222
    %v754 = vunpack.c.l.b16 %v223
    %v755 = vunpack.c.h.b16 %v223
    %v756 = vunpack.c.l.b16 %v224
    %v757 = vunpack.c.h.b16 %v224
    %v758 = vunpack.c.l.b16 %v225
    %v759 = vunpack.c.h.b16 %v225
    %v760 = vunpack.c.l.b16 %v226
    %v761 = vunpack.c.h.b16 %v226
    %v762 = vunpack.c.l.b16 %v227
    %v763 = vunpack.c.h.b16 %v227
    %v764 = vunpack.c.l.b16 %v228
    %v765 = vunpack.c.h.b16 %v228
    %v766 = vunpack.c.l.b16 %v229
    %v767 = vunpack.c.h.b16 %v229
    %v768 = vunpack.c.l.b16 %v230
    %v769 = vunpack.c.h.b16 %v230
    %v770 = vunpack.c.l.b16 %v231
    %v771 = vunpack.c.h.b16 %v231
    %v772 = vunpack.c.l.b16 %v232
    %v773 = vunpack.c.h.b16 %v232
    %v774 = vunpack.c.l.b16 %v233
    %v775 = vunpack.c.h.b16 %v233
    %v776 = vunpack.c.l.b16 %v234
    %v777 = vunpack.c.h.b16 %v234
    %v778 = vunpack.c.l.b16 %v235
    %v779 = vunpack.c.h.b16 %v235
    %v780 = vunpack.c.l.b16 %v236
    %v781 = vunpack.c.h.b16 %v236
    %v782 = vunpack.c.l.b16 %v237
    %v783 = vunpack.c.h.b16 %v237
    %v784 = vunpack.c.l.b16 %v238
    %v785 = vunpack.c.h.b16 %v238
    %v786 = vunpack.c.l.b16 %v239
    %v787 = vunpack.c.h.b16 %v239
    %v788 = vunpack.c.l.b16 %v240
    %v789 = vunpack.c.h.b16 %v240
    %v790 = vunpack.c.l.b16 %v241
    %v791 = vunpack.c.h.b16 %v241
    %v792 = vunpack.c.l.b16 %v242
    %v793 = vunpack.c.h.b16 %v242
    %v794 = vunpack.c.l.b16 %v243
    %v795 = vunpack.c.h.b16 %v243
    %v796 = vunpack.c.l.b16 %v244
    %v797 = vunpack.c.h.b16 %v244
    %v798 = vunpack.c.l.b16 %v245
    %v799 = vunpack.c.h.b16 %v245
    %v800 = vunpack.c.l.b16 %v246
    %v801 = vunpack.c.h.b16 %v246
    %v802 = vunpack.c.l.b16 %v247
    %v803 = vunpack.c.h.b16 %v247
    %v804 = vunpack.c.l.b16 %v248
    %v805 = vunpack.c.h.b16 %v248
    %v806 = vunpack.c.l.b16 %v249
    %v807 = vunpack.c.h.b16 %v249
    %v808 = vunpack.c.l.b16 %v250
    %v809 = vunpack.c.h.b16 %v250
    %v810 = vunpack.c.l.b16 %v251
    %v811 = vunpack.c.h.b16 %v251
    %v812 = vunpack.c.l.b16 %v252
    %v813 = vunpack.c.h.b16 %v252
    %v814 = vunpack.c.l.b16 %v253
    %v815 = vunpack.c.h.b16 %v253
    %v816 = vunpack.c.l.b16 %v254
    %v817 = vunpack.c.h.b16 %v254
    %v818 = vunpack.c.l.b16 %v255
    %v819 = vunpack.c.h.b16 %v255
    %v820 = vunpack.c.l.b16 %v256
    %v821 = vunpack.c.h.b16 %v256
    %v822 = vunpack.c.l.b16 %v257
    %v823 = vunpack.c.h.b16 %v257
    %v824 = vunpack.c.l.b16 %v258
    %v825 = vunpack.c.h.b16 %v258
    %v826 = vunpack.c.l.b16 %v259
    %v827 = vunpack.c.h.b16 %v259
    %v828 = vunpack.c.l.b16 %v260
    %v829 = vunpack.c.h.b16 %v260
    %v830 = vunpack.c.l.b16 %v261
    %v831 = vunpack.c.h.b16 %v261
    %v832 = vunpack.c.l.b16 %v262
    %v833 = vunpack.c.h.b16 %v262
    %v834 = vunpack.c.l.b16 %v263
    %v835 = vunpack.c.h.b16 %v263
    %v836 = vunpack.c.l.b16 %v264
    %v837 = vunpack.c.h.b16 %v264
    %v838 = vunpack.c.l.b16 %v265
    %v839 = vunpack.c.h.b16 %v265
    %v840 = vunpack.c.l.b16 %v266
    %v841 = vunpack.c.h.b16 %v266
    %v842 = vunpack.c.l.b16 %v267
    %v843 = vunpack.c.h.b16 %v267
    %v844 = vunpack.c.l.b16 %v268
    %v845 = vunpack.c.h.b16 %v268
    %v846 = vunpack.c.l.b16 %v269
    %v847 = vunpack.c.h.b16 %v269
    %v848 = vunpack.c.l.b16 %v270
    %v849 = vunpack.c.h.b16 %v270
    %v850 = vunpack.c.l.b16 %v271
    %v851 = vunpack.c.h.b16 %v271
    %v852 = vunpack.c.l.b16 %v272
    %v853 = vunpack.c.h.b16 %v272
    %v854 = vunpack.c.l.b16 %v273
    %v855 = vunpack.c.h.b16 %v273
    %v856 = vunpack.c.l.b16 %v274
    %v857 = vunpack.c.h.b16 %v274
    %v858 = vunpack.c.l.b16 %v275
    %v859 = vunpack.c.h.b16 %v275
    %v860 = vunpack.c.l.b16 %v276
    %v861 = vunpack.c.h.b16 %v276
    %v862 = vunpack.c.l.b16 %v277
    %v863 = vunpack.c.h.b16 %v277
    %v864 = vunpack.c.l.b16 %v278
    %v865 = vunpack.c.h.b16 %v278
    %v866 = vunpack.c.l.b16 %v279
    %v867 = vunpack.c.h.b16 %v279
    %v868 = vunpack.c.l.b16 %v280
    %v869 = vunpack.c.h.b16 %v280
    %v870 = vunpack.c.l.b16 %v281
    %v871 = vunpack.c.h.b16 %v281
    %v872 = vunpack.c.l.b16 %v282
    %v873 = vunpack.c.h.b16 %v282
    %v874 = vunpack.c.l.b16 %v283
    %v875 = vunpack.c.h.b16 %v283
    %v876 = vunpack.c.l.b16 %v284
    %v877 = vunpack.c.h.b16 %v284
    %v878 = vunpack.c.l.b16 %v285
    %v879 = vunpack.c.h.b16 %v285
    %v880 = vunpack.c.l.b16 %v286
    %v881 = vunpack.c.h.b16 %v286
    %v882 = vunpack.c.l.b16 %v287
    %v883 = vunpack.c.h.b16 %v287
    %v884 = vunpack.c.l.b16 %v288
    %v885 = vunpack.c.h.b16 %v288
    %v886 = vunpack.c.l.b16 %v289
    %v887 = vunpack.c.h.b16 %v289
    %v888 = vpack.c.b16 %v500, %v496
    %v889 = vpack.c.b16 %v501, %v497
    %v890 = vpack.c.b16 %v502, %v498
    %v891 = vpack.c.b16 %v503, %v499
    %v892 = vpack.c.b16 %v508, %v504
    %v893 = vpack.c.b16 %v509, %v505
    %v894 = vpack.c.b16 %v510, %v506
    %v895 = vpack.c.b16 %v511, %v507
    %v896 = vpack.c.b16 %v516, %v512
    %v897 = vpack.c.b16 %v517, %v513
    %v898 = vpack.c.b16 %v518, %v514
    %v899 = vpack.c.b16 %v519, %v515
    %v900 = vpack.c.b16 %v524, %v520
    %v901 = vpack.c.b16 %v525, %v521
    %v902 = vpack.c.b16 %v526, %v522
    %v903 = vpack.c.b16 %v527, %v523
    %v904 = vpack.c.b16 %v532, %v528
    %v905 = vpack.c.b16 %v533, %v529
    %v906 = vpack.c.b16 %v534, %v530
    %v907 = vpack.c.b16 %v535, %v531
    %v908 = vpack.c.b16 %v540, %v536
    %v909 = vpack.c.b16 %v541, %v537
    %v910 = vpack.c.b16 %v542, %v538
    %v911 = vpack.c.b16 %v543, %v539
    %v912 = vpack.c.b16 %v548, %v544
    %v913 = vpack.c.b16 %v549, %v545
    %v914 = vpack.c.b16 %v550, %v546
    %v915 = vpack.c.b16 %v551, %v547
    %v916 = vpack.c.b16 %v556, %v552
    %v917 = vpack.c.b16 %v557, %v553
    %v918 = vpack.c.b16 %v558, %v554
    %v919 = vpack.c.b16 %v559, %v555
    %v920 = vpack.c.b16 %v564, %v560
    %v921 = vpack.c.b16 %v565, %v561
    %v922 = vpack.c.b16 %v566, %v562
    %v923 = vpack.c.b16 %v567, %v563
    %v924 = vpack.c.b16 %v572, %v568
    %v925 = vpack.c.b16 %v573, %v569
    %v926 = vpack.c.b16 %v574, %v570
    %v927 = vpack.c.b16 %v575, %v571
    %v928 = vpack.c.b16 %v580, %v576
    %v929 = vpack.c.b16 %v581, %v577
    %v930 = vpack.c.b16 %v582, %v578
    %v931 = vpack.c.b16 %v583, %v579
    %v932 = vpack.c.b16 %v588, %v584
    %v933 = vpack.c.b16 %v589, %v585
    %v934 = vpack.c.b16 %v590, %v586
    %v935 = vpack.c.b16 %v591, %v587
    %v936 = vpack.c.b16 %v596, %v592
    %v937 = vpack.c.b16 %v597, %v593
    %v938 = vpack.c.b16 %v598, %v594
    %v939 = vpack.c.b16 %v599, %v595
    %v940 = vpack.c.b16 %v604, %v600
    %v941 = vpack.c.b16 %v605, %v601
    %v942 = vpack.c.b16 %v606, %v602
    %v943 = vpack.c.b16 %v607, %v603
    %v944 = vpack.c.b16 %v612, %v608
    %v945 = vpack.c.b16 %v613, %v609
    %v946 = vpack.c.b16 %v614, %v610
    %v947 = vpack.c.b16 %v615, %v611
    %v948 = vpack.c.b16 %v620, %v616
    %v949 = vpack.c.b16 %v621, %v617
    %v950 = vpack.c.b16 %v622, %v618
    %v951 = vpack.c.b16 %v623, %v619
    %v952 = vpack.c.b16 %v628, %v624
    %v953 = vpack.c.b16 %v629, %v625
    %v954 = vpack.c.b16 %v630, %v626
    %v955 = vpack.c.b16 %v631, %v627
    %v956 = vpack.c.b16 %v636, %v632
    %v957 = vpack.c.b16 %v637, %v633
    %v958 = vpack.c.b16 %v638, %v634
    %v959 = vpack.c.b16 %v639, %v635
    %v960 = vpack.c.b16 %v644, %v640
    %v961 = vpack.c.b16 %v645, %v641
    %v962 = vpack.c.b16 %v646, %v642
    %v963 = vpack.c.b16 %v647, %v643
    %v964 = vpack.c.b16 %v652, %v648
    %v965 = vpack.c.b16 %v653, %v649
    %v966 = vpack.c.b16 %v654, %v650
    %v967 = vpack.c.b16 %v655, %v651
    %v968 = vpack.c.b16 %v660, %v656
    %v969 = vpack.c.b16 %v661, %v657
    %v970 = vpack.c.b16 %v662, %v658
    %v971 = vpack.c.b16 %v663, %v659
    %v972 = vpack.c.b16 %v668, %v664
    %v973 = vpack.c.b16 %v669, %v665
    %v974 = vpack.c.b16 %v670, %v666
    %v975 = vpack.c.b16 %v671, %v667
    %v976 = vpack.c.b16 %v676, %v672
    %v977 = vpack.c.b16 %v677, %v673
    %v978 = vpack.c.b16 %v678, %v674
    %v979 = vpack.c.b16 %v679, %v675
    %v980 = vpack.c.b16 %v684, %v680
    %v981 = vpack.c.b16 %v685, %v681
    %v982 = vpack.c.b16 %v686, %v682
    %v983 = vpack.c.b16 %v687, %v683
    %v984 = vpack.c.b16 %v692, %v688
    %v985 = vpack.c.b16 %v693, %v689
    %v986 = vpack.c.b16 %v694, %v690
    %v987 = vpack.c.b16 %v695, %v691
    %v988 = vpack.c.b16 %v700, %v696
    %v989 = vpack.c.b16 %v701, %v697
    %v990 = vpack.c.b16 %v702, %v698
    %v991 = vpack.c.b16 %v703, %v699
    %v992 = vpack.c.b16 %v708, %v704
    %v993 = vpack.c.b16 %v709, %v705
    %v994 = vpack.c.b16 %v710, %v706
    %v995 = vpack.c.b16 %v711, %v707
    %v996 = vpack.c.b16 %v716, %v712
    %v997 = vpack.c.b16 %v717, %v713
    %v998 = vpack.c.b16 %v718, %v714
    %v999 = vpack.c.b16 %v719, %v715
    %v1000 = vpack.c.b16 %v724, %v720
    %v1001 = vpack.c.b16 %v725, %v721
    %v1002 = vpack.c.b16 %v726, %v722
    %v1003 = vpack.c.b16 %v727, %v723
    %v1004 = vpack.c.b16 %v732, %v728
    %v1005 = vpack.c.b16 %v733, %v729
    %v1006 = vpack.c.b16 %v734, %v730
    %v1007 = vpack.c.b16 %v735, %v731
    %v1008 = vpack.c.b16 %v740, %v736
    %v1009 = vpack.c.b16 %v741, %v737
    %v1010 = vpack.c.b16 %v742, %v738
    %v1011 = vpack.c.b16 %v743, %v739
    %v1012 = vpack.c.b16 %v748, %v744
    %v1013 = vpack.c.b16 %v749, %v745
    %v1014 = vpack.c.b16 %v750, %v746
    %v1015 = vpack.c.b16 %v751, %v747
    %v1016 = vpack.c.b16 %v756, %v752
    %v1017 = vpack.c.b16 %v757, %v753
    %v1018 = vpack.c.b16 %v758, %v754
    %v1019 = vpack.c.b16 %v759, %v755
    %v1020 = vpack.c.b16 %v764, %v760
    %v1021 = vpack.c.b16 %v765, %v761
    %v1022 = vpack.c.b16 %v766, %v762
    %v1023 = vpack.c.b16 %v767, %v763
    %v1024 = vpack.c.b16 %v772, %v768
    %v1025 = vpack.c.b16 %v773, %v769
    %v1026 = vpack.c.b16 %v774, %v770
    %v1027 = vpack.c.b16 %v775, %v771
    %v1028 = vpack.c.b16 %v780, %v776
    %v1029 = vpack.c.b16 %v781, %v777
    %v1030 = vpack.c.b16 %v782, %v778
    %v1031 = vpack.c.b16 %v783, %v779
    %v1032 = vpack.c.b16 %v788, %v784
    %v1033 = vpack.c.b16 %v789, %v785
    %v1034 = vpack.c.b16 %v790, %v786
    %v1035 = vpack.c.b16 %v791, %v787
    %v1036 = vpack.c.b16 %v796, %v792
    %v1037 = vpack.c.b16 %v797, %v793
    %v1038 = vpack.c.b16 %v798, %v794
    %v1039 = vpack.c.b16 %v799, %v795
    %v1040 = vpack.c.b16 %v804, %v800
    %v1041 = vpack.c.b16 %v805, %v801
    %v1042 = vpack.c.b16 %v806, %v802
    %v1043 = vpack.c.b16 %v807, %v803
    %v1044 = vpack.c.b16 %v812, %v808
    %v1045 = vpack.c.b16 %v813, %v809
    %v1046 = vpack.c.b16 %v814, %v810
    %v1047 = vpack.c.b16 %v815, %v811
    %v1048 = vpack.c.b16 %v820, %v816
    %v1049 = vpack.c.b16 %v821, %v817
    %v1050 = vpack.c.b16 %v822, %v818
    %v1051 = vpack.c.b16 %v823, %v819
    %v1052 = vpack.c.b16 %v828, %v824
    %v1053 = vpack.c.b16 %v829, %v825
    %v1054 = vpack.c.b16 %v830, %v826
    %v1055 = vpack.c.b16 %v831, %v827
    %v1056 = vpack.c.b16 %v836, %v832
    %v1057 = vpack.c.b16 %v837, %v833
    %v1058 = vpack.c.b16 %v838, %v834
    %v1059 = vpack.c.b16 %v839, %v835
    %v1060 = vpack.c.b16 %v844, %v840
    %v1061 = vpack.c.b16 %v845, %v841
    %v1062 = vpack.c.b16 %v846, %v842
    %v1063 = vpack.c.b16 %v847, %v843
    %v1064 = vpack.c.b16 %v852, %v848
    %v1065 = vpack.c.b16 %v853, %v849
    %v1066 = vpack.c.b16 %v854, %v850
    %v1067 = vpack.c.b16 %v855, %v851
    %v1068 = vpack.c.b16 %v860, %v856
    %v1069 = vpack.c.b16 %v861, %v857
    %v1070 = vpack.c.b16 %v862, %v858
    %v1071 = vpack.c.b16 %v863, %v859
    %v1072 = vpack.c.b16 %v868, %v864
    %v1073 = vpack.c.b16 %v869, %v865
    %v1074 = vpack.c.b16 %v870, %v866
    %v1075 = vpack.c.b16 %v871, %v867
    %v1076 = vpack.c.b16 %v876, %v872
    %v1077 = vpack.c.b16 %v877, %v873
    %v1078 = vpack.c.b16 %v878, %v874
    %v1079 = vpack.c.b16 %v879, %v875
    %v1080 = vpack.c.b16 %v884, %v880
    %v1081 = vpack.c.b16 %v885, %v881
    %v1082 = vpack.c.b16 %v886, %v882
    %v1083 = vpack.c.b16 %v887, %v883
    %vm1280 = vcmask 130048
    %v1282 = vsel %vm1280, %v93, 0
    %1284 = vmatpush.bf16.msra.mxu0 %v916
    %1285 = vmatpush.bf16.msra.mxu0 %v912
    %1286 = vmatpush.bf16.msra.mxu0 %v908
    %1287 = vmatpush.bf16.msra.mxu0 %v904
    %1288 = vmatpush.bf16.msra.mxu0 %v900
    %1289 = vmatpush.bf16.msra.mxu0 %v896
    %1290 = vmatpush.bf16.msra.mxu0 %v892
    %1291 = vmatpush.bf16.msra.mxu0 %v888
    %1292 = vmatmul.bf16.gmra.mxu0 %v87
    %v1293 = vpop.f32.mrf.mxu0
    %v1294 = vadd.f32 %v292, %v1293
    %v1295 = vpop.f32.mrf.mxu0
    %1296 = vdwg.mxu0
    %1297 = vmatpush.bf16.msra.mxu0 %v948
    %1298 = vmatpush.bf16.msra.mxu0 %v944
    %1299 = vmatpush.bf16.msra.mxu0 %v940
    %1300 = vmatpush.bf16.msra.mxu0 %v936
    %1301 = vmatpush.bf16.msra.mxu0 %v932
    %1302 = vmatpush.bf16.msra.mxu0 %v928
    %1303 = vmatpush.bf16.msra.mxu0 %v924
    %1304 = vmatpush.bf16.msra.mxu0 %v920
    %1305 = vmatmul.bf16.gmra.mxu0 %v88
    %v1306 = vpop.f32.mrf.mxu0
    %v1307 = vadd.f32 %v1294, %v1306
    %v1308 = vpop.f32.mrf.mxu0
    %1309 = vdwg.mxu0
    %1310 = vmatpush.bf16.msra.mxu0 %v980
    %1311 = vmatpush.bf16.msra.mxu0 %v976
    %1312 = vmatpush.bf16.msra.mxu0 %v972
    %1313 = vmatpush.bf16.msra.mxu0 %v968
    %1314 = vmatpush.bf16.msra.mxu0 %v964
    %1315 = vmatpush.bf16.msra.mxu0 %v960
    %1316 = vmatpush.bf16.msra.mxu0 %v956
    %1317 = vmatpush.bf16.msra.mxu0 %v952
    %1318 = vmatmul.bf16.gmra.mxu0 %v89
    %v1319 = vpop.f32.mrf.mxu0
    %v1320 = vadd.f32 %v1307, %v1319
    %v1321 = vpop.f32.mrf.mxu0
    %1322 = vdwg.mxu0
    %1323 = vmatpush.bf16.msra.mxu0 %v1012
    %1324 = vmatpush.bf16.msra.mxu0 %v1008
    %1325 = vmatpush.bf16.msra.mxu0 %v1004
    %1326 = vmatpush.bf16.msra.mxu0 %v1000
    %1327 = vmatpush.bf16.msra.mxu0 %v996
    %1328 = vmatpush.bf16.msra.mxu0 %v992
    %1329 = vmatpush.bf16.msra.mxu0 %v988
    %1330 = vmatpush.bf16.msra.mxu0 %v984
    %1331 = vmatmul.bf16.gmra.mxu0 %v90
    %v1332 = vpop.f32.mrf.mxu0
    %v1333 = vadd.f32 %v1320, %v1332
    %v1334 = vpop.f32.mrf.mxu0
    %1335 = vdwg.mxu0
    %1336 = vmatpush.bf16.msra.mxu0 %v1044
    %1337 = vmatpush.bf16.msra.mxu0 %v1040
    %1338 = vmatpush.bf16.msra.mxu0 %v1036
    %1339 = vmatpush.bf16.msra.mxu0 %v1032
    %1340 = vmatpush.bf16.msra.mxu0 %v1028
    %1341 = vmatpush.bf16.msra.mxu0 %v1024
    %1342 = vmatpush.bf16.msra.mxu0 %v1020
    %1343 = vmatpush.bf16.msra.mxu0 %v1016
    %1344 = vmatmul.bf16.gmra.mxu0 %v91
    %v1345 = vpop.f32.mrf.mxu0
    %v1346 = vadd.f32 %v1333, %v1345
    %v1347 = vpop.f32.mrf.mxu0
    %1348 = vdwg.mxu0
    %1349 = vmatpush.bf16.msra.mxu0 %v1076
    %1350 = vmatpush.bf16.msra.mxu0 %v1072
    %1351 = vmatpush.bf16.msra.mxu0 %v1068
    %1352 = vmatpush.bf16.msra.mxu0 %v1064
    %1353 = vmatpush.bf16.msra.mxu0 %v1060
    %1354 = vmatpush.bf16.msra.mxu0 %v1056
    %1355 = vmatpush.bf16.msra.mxu0 %v1052
    %1356 = vmatpush.bf16.msra.mxu0 %v1048
    %1357 = vmatmul.bf16.gmra.mxu0 %v92
    %v1358 = vpop.f32.mrf.mxu0
    %v1359 = vadd.f32 %v1346, %v1358
    %v1360 = vpop.f32.mrf.mxu0
    %1361 = vdwg.mxu0
    %1362 = vmatpush.bf16.msra.mxu0 0
    %1363 = vmatpush.bf16.msra.mxu0 0
    %1364 = vmatpush.bf16.msra.mxu0 0
    %1365 = vmatpush.bf16.msra.mxu0 0
    %1366 = vmatpush.bf16.msra.mxu0 0
    %1367 = vmatpush.bf16.msra.mxu0 0
    %1368 = vmatpush.bf16.msra.mxu0 0
    %1369 = vmatpush.bf16.msra.mxu0 %v1080
    %1370 = vmatmul.bf16.gmra.mxu0 %v1282
    %v1371 = vpop.f32.mrf.mxu0
    %v1372 = vadd.f32 %v1359, %v1371
    %v1373 = vpop.f32.mrf.mxu0
    %1374 = vdwg.mxu0
    %1375 = vmatpush.bf16.msra.mxu0 %v917
    %1376 = vmatpush.bf16.msra.mxu0 %v913
    %1377 = vmatpush.bf16.msra.mxu0 %v909
    %1378 = vmatpush.bf16.msra.mxu0 %v905
    %1379 = vmatpush.bf16.msra.mxu0 %v901
    %1380 = vmatpush.bf16.msra.mxu0 %v897
    %1381 = vmatpush.bf16.msra.mxu0 %v893
    %1382 = vmatpush.bf16.msra.mxu0 %v889
    %1383 = vmatmul.bf16.gmra.mxu0 %v87
    %v1384 = vpop.f32.mrf.mxu0
    %v1385 = vadd.f32 %v293, %v1384
    %v1386 = vpop.f32.mrf.mxu0
    %1387 = vdwg.mxu0
    %1388 = vmatpush.bf16.msra.mxu0 %v949
    %1389 = vmatpush.bf16.msra.mxu0 %v945
    %1390 = vmatpush.bf16.msra.mxu0 %v941
    %1391 = vmatpush.bf16.msra.mxu0 %v937
    %1392 = vmatpush.bf16.msra.mxu0 %v933
    %1393 = vmatpush.bf16.msra.mxu0 %v929
    %1394 = vmatpush.bf16.msra.mxu0 %v925
    %1395 = vmatpush.bf16.msra.mxu0 %v921
    %1396 = vmatmul.bf16.gmra.mxu0 %v88
    %v1397 = vpop.f32.mrf.mxu0
    %v1398 = vadd.f32 %v1385, %v1397
    %v1399 = vpop.f32.mrf.mxu0
    %1400 = vdwg.mxu0
    %1401 = vmatpush.bf16.msra.mxu0 %v981
    %1402 = vmatpush.bf16.msra.mxu0 %v977
    %1403 = vmatpush.bf16.msra.mxu0 %v973
    %1404 = vmatpush.bf16.msra.mxu0 %v969
    %1405 = vmatpush.bf16.msra.mxu0 %v965
    %1406 = vmatpush.bf16.msra.mxu0 %v961
    %1407 = vmatpush.bf16.msra.mxu0 %v957
    %1408 = vmatpush.bf16.msra.mxu0 %v953
    %1409 = vmatmul.bf16.gmra.mxu0 %v89
    %v1410 = vpop.f32.mrf.mxu0
    %v1411 = vadd.f32 %v1398, %v1410
    %v1412 = vpop.f32.mrf.mxu0
    %1413 = vdwg.mxu0
    %1414 = vmatpush.bf16.msra.mxu0 %v1013
    %1415 = vmatpush.bf16.msra.mxu0 %v1009
    %1416 = vmatpush.bf16.msra.mxu0 %v1005
    %1417 = vmatpush.bf16.msra.mxu0 %v1001
    %1418 = vmatpush.bf16.msra.mxu0 %v997
    %1419 = vmatpush.bf16.msra.mxu0 %v993
    %1420 = vmatpush.bf16.msra.mxu0 %v989
    %1421 = vmatpush.bf16.msra.mxu0 %v985
    %1422 = vmatmul.bf16.gmra.mxu0 %v90
    %v1423 = vpop.f32.mrf.mxu0
    %v1424 = vadd.f32 %v1411, %v1423
    %v1425 = vpop.f32.mrf.mxu0
    %1426 = vdwg.mxu0
    %1427 = vmatpush.bf16.msra.mxu0 %v1045
    %1428 = vmatpush.bf16.msra.mxu0 %v1041
    %1429 = vmatpush.bf16.msra.mxu0 %v1037
    %1430 = vmatpush.bf16.msra.mxu0 %v1033
    %1431 = vmatpush.bf16.msra.mxu0 %v1029
    %1432 = vmatpush.bf16.msra.mxu0 %v1025
    %1433 = vmatpush.bf16.msra.mxu0 %v1021
    %1434 = vmatpush.bf16.msra.mxu0 %v1017
    %1435 = vmatmul.bf16.gmra.mxu0 %v91
    %v1436 = vpop.f32.mrf.mxu0
    %v1437 = vadd.f32 %v1424, %v1436
    %v1438 = vpop.f32.mrf.mxu0
    %1439 = vdwg.mxu0
    %1440 = vmatpush.bf16.msra.mxu0 %v1077
    %1441 = vmatpush.bf16.msra.mxu0 %v1073
    %1442 = vmatpush.bf16.msra.mxu0 %v1069
    %1443 = vmatpush.bf16.msra.mxu0 %v1065
    %1444 = vmatpush.bf16.msra.mxu0 %v1061
    %1445 = vmatpush.bf16.msra.mxu0 %v1057
    %1446 = vmatpush.bf16.msra.mxu0 %v1053
    %1447 = vmatpush.bf16.msra.mxu0 %v1049
    %1448 = vmatmul.bf16.gmra.mxu0 %v92
    %v1449 = vpop.f32.mrf.mxu0
    %v1450 = vadd.f32 %v1437, %v1449
    %v1451 = vpop.f32.mrf.mxu0
    %1452 = vdwg.mxu0
    %1453 = vmatpush.bf16.msra.mxu0 0
    %1454 = vmatpush.bf16.msra.mxu0 0
    %1455 = vmatpush.bf16.msra.mxu0 0
    %1456 = vmatpush.bf16.msra.mxu0 0
    %1457 = vmatpush.bf16.msra.mxu0 0
    %1458 = vmatpush.bf16.msra.mxu0 0
    %1459 = vmatpush.bf16.msra.mxu0 0
    %1460 = vmatpush.bf16.msra.mxu0 %v1081
    %1461 = vmatmul.bf16.gmra.mxu0 %v1282
    %v1462 = vpop.f32.mrf.mxu0
    %v1463 = vadd.f32 %v1450, %v1462
    %v1464 = vpop.f32.mrf.mxu0
    %1465 = vdwg.mxu0
    %1466 = vmatpush.bf16.msra.mxu0 %v918
    %1467 = vmatpush.bf16.msra.mxu0 %v914
    %1468 = vmatpush.bf16.msra.mxu0 %v910
    %1469 = vmatpush.bf16.msra.mxu0 %v906
    %1470 = vmatpush.bf16.msra.mxu0 %v902
    %1471 = vmatpush.bf16.msra.mxu0 %v898
    %1472 = vmatpush.bf16.msra.mxu0 %v894
    %1473 = vmatpush.bf16.msra.mxu0 %v890
    %1474 = vmatmul.bf16.gmra.mxu0 %v87
    %v1475 = vpop.f32.mrf.mxu0
    %v1476 = vadd.f32 %v294, %v1475
    %v1477 = vpop.f32.mrf.mxu0
    %1478 = vdwg.mxu0
    %1479 = vmatpush.bf16.msra.mxu0 %v950
    %1480 = vmatpush.bf16.msra.mxu0 %v946
    %1481 = vmatpush.bf16.msra.mxu0 %v942
    %1482 = vmatpush.bf16.msra.mxu0 %v938
    %1483 = vmatpush.bf16.msra.mxu0 %v934
    %1484 = vmatpush.bf16.msra.mxu0 %v930
    %1485 = vmatpush.bf16.msra.mxu0 %v926
    %1486 = vmatpush.bf16.msra.mxu0 %v922
    %1487 = vmatmul.bf16.gmra.mxu0 %v88
    %v1488 = vpop.f32.mrf.mxu0
    %v1489 = vadd.f32 %v1476, %v1488
    %v1490 = vpop.f32.mrf.mxu0
    %1491 = vdwg.mxu0
    %1492 = vmatpush.bf16.msra.mxu0 %v982
    %1493 = vmatpush.bf16.msra.mxu0 %v978
    %1494 = vmatpush.bf16.msra.mxu0 %v974
    %1495 = vmatpush.bf16.msra.mxu0 %v970
    %1496 = vmatpush.bf16.msra.mxu0 %v966
    %1497 = vmatpush.bf16.msra.mxu0 %v962
    %1498 = vmatpush.bf16.msra.mxu0 %v958
    %1499 = vmatpush.bf16.msra.mxu0 %v954
    %1500 = vmatmul.bf16.gmra.mxu0 %v89
    %v1501 = vpop.f32.mrf.mxu0
    %v1502 = vadd.f32 %v1489, %v1501
    %v1503 = vpop.f32.mrf.mxu0
    %1504 = vdwg.mxu0
    %1505 = vmatpush.bf16.msra.mxu0 %v1014
    %1506 = vmatpush.bf16.msra.mxu0 %v1010
    %1507 = vmatpush.bf16.msra.mxu0 %v1006
    %1508 = vmatpush.bf16.msra.mxu0 %v1002
    %1509 = vmatpush.bf16.msra.mxu0 %v998
    %1510 = vmatpush.bf16.msra.mxu0 %v994
    %1511 = vmatpush.bf16.msra.mxu0 %v990
    %1512 = vmatpush.bf16.msra.mxu0 %v986
    %1513 = vmatmul.bf16.gmra.mxu0 %v90
    %v1514 = vpop.f32.mrf.mxu0
    %v1515 = vadd.f32 %v1502, %v1514
    %v1516 = vpop.f32.mrf.mxu0
    %1517 = vdwg.mxu0
    %1518 = vmatpush.bf16.msra.mxu0 %v1046
    %1519 = vmatpush.bf16.msra.mxu0 %v1042
    %1520 = vmatpush.bf16.msra.mxu0 %v1038
    %1521 = vmatpush.bf16.msra.mxu0 %v1034
    %1522 = vmatpush.bf16.msra.mxu0 %v1030
    %1523 = vmatpush.bf16.msra.mxu0 %v1026
    %1524 = vmatpush.bf16.msra.mxu0 %v1022
    %1525 = vmatpush.bf16.msra.mxu0 %v1018
    %1526 = vmatmul.bf16.gmra.mxu0 %v91
    %v1527 = vpop.f32.mrf.mxu0
    %v1528 = vadd.f32 %v1515, %v1527
    %v1529 = vpop.f32.mrf.mxu0
    %1530 = vdwg.mxu0
    %1531 = vmatpush.bf16.msra.mxu0 %v1078
    %1532 = vmatpush.bf16.msra.mxu0 %v1074
    %1533 = vmatpush.bf16.msra.mxu0 %v1070
    %1534 = vmatpush.bf16.msra.mxu0 %v1066
    %1535 = vmatpush.bf16.msra.mxu0 %v1062
    %1536 = vmatpush.bf16.msra.mxu0 %v1058
    %1537 = vmatpush.bf16.msra.mxu0 %v1054
    %1538 = vmatpush.bf16.msra.mxu0 %v1050
    %1539 = vmatmul.bf16.gmra.mxu0 %v92
    %v1540 = vpop.f32.mrf.mxu0
    %v1541 = vadd.f32 %v1528, %v1540
    %v1542 = vpop.f32.mrf.mxu0
    %1543 = vdwg.mxu0
    %1544 = vmatpush.bf16.msra.mxu0 0
    %1545 = vmatpush.bf16.msra.mxu0 0
    %1546 = vmatpush.bf16.msra.mxu0 0
    %1547 = vmatpush.bf16.msra.mxu0 0
    %1548 = vmatpush.bf16.msra.mxu0 0
    %1549 = vmatpush.bf16.msra.mxu0 0
    %1550 = vmatpush.bf16.msra.mxu0 0
    %1551 = vmatpush.bf16.msra.mxu0 %v1082
    %1552 = vmatmul.bf16.gmra.mxu0 %v1282
    %v1553 = vpop.f32.mrf.mxu0
    %v1554 = vadd.f32 %v1541, %v1553
    %v1555 = vpop.f32.mrf.mxu0
    %1556 = vdwg.mxu0
    %1557 = vmatpush.bf16.msra.mxu0 %v919
    %1558 = vmatpush.bf16.msra.mxu0 %v915
    %1559 = vmatpush.bf16.msra.mxu0 %v911
    %1560 = vmatpush.bf16.msra.mxu0 %v907
    %1561 = vmatpush.bf16.msra.mxu0 %v903
    %1562 = vmatpush.bf16.msra.mxu0 %v899
    %1563 = vmatpush.bf16.msra.mxu0 %v895
    %1564 = vmatpush.bf16.msra.mxu0 %v891
    %1565 = vmatmul.bf16.gmra.mxu0 %v87
    %v1566 = vpop.f32.mrf.mxu0
    %v1567 = vadd.f32 %v295, %v1566
    %v1568 = vpop.f32.mrf.mxu0
    %1569 = vdwg.mxu0
    %1570 = vmatpush.bf16.msra.mxu0 %v951
    %1571 = vmatpush.bf16.msra.mxu0 %v947
    %1572 = vmatpush.bf16.msra.mxu0 %v943
    %1573 = vmatpush.bf16.msra.mxu0 %v939
    %1574 = vmatpush.bf16.msra.mxu0 %v935
    %1575 = vmatpush.bf16.msra.mxu0 %v931
    %1576 = vmatpush.bf16.msra.mxu0 %v927
    %1577 = vmatpush.bf16.msra.mxu0 %v923
    %1578 = vmatmul.bf16.gmra.mxu0 %v88
    %v1579 = vpop.f32.mrf.mxu0
    %v1580 = vadd.f32 %v1567, %v1579
    %v1581 = vpop.f32.mrf.mxu0
    %1582 = vdwg.mxu0
    %1583 = vmatpush.bf16.msra.mxu0 %v983
    %1584 = vmatpush.bf16.msra.mxu0 %v979
    %1585 = vmatpush.bf16.msra.mxu0 %v975
    %1586 = vmatpush.bf16.msra.mxu0 %v971
    %1587 = vmatpush.bf16.msra.mxu0 %v967
    %1588 = vmatpush.bf16.msra.mxu0 %v963
    %1589 = vmatpush.bf16.msra.mxu0 %v959
    %1590 = vmatpush.bf16.msra.mxu0 %v955
    %1591 = vmatmul.bf16.gmra.mxu0 %v89
    %v1592 = vpop.f32.mrf.mxu0
    %v1593 = vadd.f32 %v1580, %v1592
    %v1594 = vpop.f32.mrf.mxu0
    %1595 = vdwg.mxu0
    %1596 = vmatpush.bf16.msra.mxu0 %v1015
    %1597 = vmatpush.bf16.msra.mxu0 %v1011
    %1598 = vmatpush.bf16.msra.mxu0 %v1007
    %1599 = vmatpush.bf16.msra.mxu0 %v1003
    %1600 = vmatpush.bf16.msra.mxu0 %v999
    %1601 = vmatpush.bf16.msra.mxu0 %v995
    %1602 = vmatpush.bf16.msra.mxu0 %v991
    %1603 = vmatpush.bf16.msra.mxu0 %v987
    %1604 = vmatmul.bf16.gmra.mxu0 %v90
    %v1605 = vpop.f32.mrf.mxu0
    %v1606 = vadd.f32 %v1593, %v1605
    %v1607 = vpop.f32.mrf.mxu0
    %1608 = vdwg.mxu0
    %1609 = vmatpush.bf16.msra.mxu0 %v1047
    %1610 = vmatpush.bf16.msra.mxu0 %v1043
    %1611 = vmatpush.bf16.msra.mxu0 %v1039
    %1612 = vmatpush.bf16.msra.mxu0 %v1035
    %1613 = vmatpush.bf16.msra.mxu0 %v1031
    %1614 = vmatpush.bf16.msra.mxu0 %v1027
    %1615 = vmatpush.bf16.msra.mxu0 %v1023
    %1616 = vmatpush.bf16.msra.mxu0 %v1019
    %1617 = vmatmul.bf16.gmra.mxu0 %v91
    %v1618 = vpop.f32.mrf.mxu0
    %v1619 = vadd.f32 %v1606, %v1618
    %v1620 = vpop.f32.mrf.mxu0
    %1621 = vdwg.mxu0
    %1622 = vmatpush.bf16.msra.mxu0 %v1079
    %1623 = vmatpush.bf16.msra.mxu0 %v1075
    %1624 = vmatpush.bf16.msra.mxu0 %v1071
    %1625 = vmatpush.bf16.msra.mxu0 %v1067
    %1626 = vmatpush.bf16.msra.mxu0 %v1063
    %1627 = vmatpush.bf16.msra.mxu0 %v1059
    %1628 = vmatpush.bf16.msra.mxu0 %v1055
    %1629 = vmatpush.bf16.msra.mxu0 %v1051
    %1630 = vmatmul.bf16.gmra.mxu0 %v92
    %v1631 = vpop.f32.mrf.mxu0
    %v1632 = vadd.f32 %v1619, %v1631
    %v1633 = vpop.f32.mrf.mxu0
    %1634 = vdwg.mxu0
    %1635 = vmatpush.bf16.msra.mxu0 0
    %1636 = vmatpush.bf16.msra.mxu0 0
    %1637 = vmatpush.bf16.msra.mxu0 0
    %1638 = vmatpush.bf16.msra.mxu0 0
    %1639 = vmatpush.bf16.msra.mxu0 0
    %1640 = vmatpush.bf16.msra.mxu0 0
    %1641 = vmatpush.bf16.msra.mxu0 0
    %1642 = vmatpush.bf16.msra.mxu0 %v1083
    %1643 = vmatmul.bf16.gmra.mxu0 %v1282
    %v1644 = vpop.f32.mrf.mxu0
    %v1645 = vadd.f32 %v1632, %v1644
    %v1646 = vpop.f32.mrf.mxu0
    %1647 = vdwg.mxu0
    %v1648 = vsub.f32 0.0, %v1372
    %v1649 = vsub.f32 0.0, %v1463
    %v1650 = vsub.f32 0.0, %v1554
    %v1651 = vsub.f32 0.0, %v1645
    %v1652 = vmul.f32 %v1648, 1.442695
    %v1653 = vpow.pop %v1652
    %v1654 = vmul.f32 %v1649, 1.442695
    %v1655 = vpow.pop %v1654
    %v1656 = vmul.f32 %v1650, 1.442695
    %v1657 = vpow.pop %v1656
    %v1658 = vmul.f32 %v1651, 1.442695
    %v1659 = vpow.pop %v1658
    %v1660 = vadd.f32 %v1653, 1.0
    %v1661 = vadd.f32 %v1655, 1.0
    %v1662 = vadd.f32 %v1657, 1.0
    %v1663 = vadd.f32 %v1659, 1.0
    %v1664 = vrcp.pop %v1660
    %v1665 = vrcp.pop %v1661
    %v1666 = vrcp.pop %v1662
    %v1667 = vrcp.pop %v1663
    %v1668 = vpack.c.bf16 %v1664, %v1664
    %v1669 = vpack.c.bf16 %v1665, %v1665
    %v1670 = vpack.c.bf16 %v1666, %v1666
    %v1671 = vpack.c.bf16 %v1667, %v1667
    %v1672 = vld [vmem:[#allocation4] sm:$0xff]
    %v1673 = vld [vmem:[#allocation4 + $0x8] sm:$0xff]
    %v1674 = vld [vmem:[#allocation4 + $0x10] sm:$0xff]
    %v1675 = vld [vmem:[#allocation4 + $0x18] sm:$0xff]
    %v1676 = vld [vmem:[#allocation4 + $0x20] sm:$0xff]
    %v1677 = vld [vmem:[#allocation4 + $0x28] sm:$0xff]
    %v1678 = vld [vmem:[#allocation4 + $0x30] sm:$0xff]
    %v1679 = vld [vmem:[#allocation4 + $0x38] sm:$0xff]
    %v1680 = vld [vmem:[#allocation4 + $0x40] sm:$0xff]
    %v1681 = vld [vmem:[#allocation4 + $0x48] sm:$0xff]
    %v1682 = vld [vmem:[#allocation4 + $0x50] sm:$0xff]
    %v1683 = vld [vmem:[#allocation4 + $0x58] sm:$0xff]
    %v1684 = vld [vmem:[#allocation4 + $0x60] sm:$0xff]
    %v1685 = vld [vmem:[#allocation4 + $0x68] sm:$0xff]
    %v1686 = vld [vmem:[#allocation4 + $0x70] sm:$0xff]
    %v1687 = vld [vmem:[#allocation4 + $0x78] sm:$0xff]
    %v1688 = vld [vmem:[#allocation4 + $0x80] sm:$0xff]
    %v1689 = vld [vmem:[#allocation4 + $0x88] sm:$0xff]
    %v1690 = vld [vmem:[#allocation4 + $0x90] sm:$0xff]
    %v1691 = vld [vmem:[#allocation4 + $0x98] sm:$0xff]
    %v1692 = vld [vmem:[#allocation4 + $0xa0] sm:$0xff]
    %v1693 = vld [vmem:[#allocation4 + $0xa8] sm:$0xff]
    %v1694 = vld [vmem:[#allocation4 + $0xb0] sm:$0xff]
    %v1695 = vld [vmem:[#allocation4 + $0xb8] sm:$0xff]
    %v1696 = vld [vmem:[#allocation4 + $0xc0] sm:$0xff]
    %v1697 = vld [vmem:[#allocation4 + $0xc8] sm:$0xff]
    %v1698 = vld [vmem:[#allocation4 + $0xd0] sm:$0xff]
    %v1699 = vld [vmem:[#allocation4 + $0xd8] sm:$0xff]
    %v1700 = vld [vmem:[#allocation4 + $0xe0] sm:$0xff]
    %v1701 = vld [vmem:[#allocation4 + $0xe8] sm:$0xff]
    %v1702 = vld [vmem:[#allocation4 + $0xf0] sm:$0xff]
    %v1703 = vld [vmem:[#allocation4 + $0xf8] sm:$0xff]
    %v1704 = vld [vmem:[#allocation4 + $0x100] sm:$0xff]
    %v1705 = vld [vmem:[#allocation4 + $0x108] sm:$0xff]
    %v1706 = vld [vmem:[#allocation4 + $0x110] sm:$0xff]
    %v1707 = vld [vmem:[#allocation4 + $0x118] sm:$0xff]
    %v1708 = vld [vmem:[#allocation4 + $0x120] sm:$0xff]
    %v1709 = vld [vmem:[#allocation4 + $0x128] sm:$0xff]
    %v1710 = vld [vmem:[#allocation4 + $0x130] sm:$0xff]
    %v1711 = vld [vmem:[#allocation4 + $0x138] sm:$0xff]
    %v1712 = vld [vmem:[#allocation4 + $0x140] sm:$0xff]
    %v1713 = vld [vmem:[#allocation4 + $0x148] sm:$0xff]
    %v1714 = vld [vmem:[#allocation4 + $0x150] sm:$0xff]
    %v1715 = vld [vmem:[#allocation4 + $0x158] sm:$0xff]
    %v1716 = vld [vmem:[#allocation4 + $0x160] sm:$0xff]
    %v1717 = vld [vmem:[#allocation4 + $0x168] sm:$0xff]
    %v1718 = vld [vmem:[#allocation4 + $0x170] sm:$0xff]
    %v1719 = vld [vmem:[#allocation4 + $0x178] sm:$0xff]
    %v1720 = vld [vmem:[#allocation4 + $0x180] sm:$0xff]
    %v1721 = vld [vmem:[#allocation4 + $0x188] sm:$0xff]
    %v1722 = vld [vmem:[#allocation4 + $0x190] sm:$0xff]
    %v1723 = vld [vmem:[#allocation4 + $0x198] sm:$0xff]
    %v1724 = vld [vmem:[#allocation4 + $0x1a0] sm:$0xff]
    %v1725 = vld [vmem:[#allocation4 + $0x1a8] sm:$0xff]
    %v1726 = vld [vmem:[#allocation4 + $0x1b0] sm:$0xff]
    %v1727 = vld [vmem:[#allocation4 + $0x1b8] sm:$0xff]
    %v1728 = vld [vmem:[#allocation4 + $0x1c0] sm:$0xff]
    %v1729 = vld [vmem:[#allocation4 + $0x1c8] sm:$0xff]
    %v1730 = vld [vmem:[#allocation4 + $0x1d0] sm:$0xff]
    %v1731 = vld [vmem:[#allocation4 + $0x1d8] sm:$0xff]
    %v1732 = vld [vmem:[#allocation4 + $0x1e0] sm:$0xff]
    %v1733 = vld [vmem:[#allocation4 + $0x1e8] sm:$0xff]
    %v1734 = vld [vmem:[#allocation4 + $0x1f0] sm:$0xff]
    %v1735 = vld [vmem:[#allocation4 + $0x1f8] sm:$0xff]
    %v1736 = vld [vmem:[%s4] sm:$0x3]
    %v1738 = vperm.slane %v1736, 0
    %v1739 = vperm.slane %v1736, 1
    %v1806 = vunpack.c.l.b16 %v1672
    %v1807 = vunpack.c.h.b16 %v1672
    %v1808 = vunpack.c.l.b16 %v1673
    %v1809 = vunpack.c.h.b16 %v1673
    %v1810 = vunpack.c.l.b16 %v1674
    %v1811 = vunpack.c.h.b16 %v1674
    %v1812 = vunpack.c.l.b16 %v1675
    %v1813 = vunpack.c.h.b16 %v1675
    %v1814 = vunpack.c.l.b16 %v1676
    %v1815 = vunpack.c.h.b16 %v1676
    %v1816 = vunpack.c.l.b16 %v1677
    %v1817 = vunpack.c.h.b16 %v1677
    %v1818 = vunpack.c.l.b16 %v1678
    %v1819 = vunpack.c.h.b16 %v1678
    %v1820 = vunpack.c.l.b16 %v1679
    %v1821 = vunpack.c.h.b16 %v1679
    %v1822 = vunpack.c.l.b16 %v1680
    %v1823 = vunpack.c.h.b16 %v1680
    %v1824 = vunpack.c.l.b16 %v1681
    %v1825 = vunpack.c.h.b16 %v1681
    %v1826 = vunpack.c.l.b16 %v1682
    %v1827 = vunpack.c.h.b16 %v1682
    %v1828 = vunpack.c.l.b16 %v1683
    %v1829 = vunpack.c.h.b16 %v1683
    %v1830 = vunpack.c.l.b16 %v1684
    %v1831 = vunpack.c.h.b16 %v1684
    %v1832 = vunpack.c.l.b16 %v1685
    %v1833 = vunpack.c.h.b16 %v1685
    %v1834 = vunpack.c.l.b16 %v1686
    %v1835 = vunpack.c.h.b16 %v1686
    %v1836 = vunpack.c.l.b16 %v1687
    %v1837 = vunpack.c.h.b16 %v1687
    %v1838 = vunpack.c.l.b16 %v1688
    %v1839 = vunpack.c.h.b16 %v1688
    %v1840 = vunpack.c.l.b16 %v1689
    %v1841 = vunpack.c.h.b16 %v1689
    %v1842 = vunpack.c.l.b16 %v1690
    %v1843 = vunpack.c.h.b16 %v1690
    %v1844 = vunpack.c.l.b16 %v1691
    %v1845 = vunpack.c.h.b16 %v1691
    %v1846 = vunpack.c.l.b16 %v1692
    %v1847 = vunpack.c.h.b16 %v1692
    %v1848 = vunpack.c.l.b16 %v1693
    %v1849 = vunpack.c.h.b16 %v1693
    %v1850 = vunpack.c.l.b16 %v1694
    %v1851 = vunpack.c.h.b16 %v1694
    %v1852 = vunpack.c.l.b16 %v1695
    %v1853 = vunpack.c.h.b16 %v1695
    %v1854 = vunpack.c.l.b16 %v1696
    %v1855 = vunpack.c.h.b16 %v1696
    %v1856 = vunpack.c.l.b16 %v1697
    %v1857 = vunpack.c.h.b16 %v1697
    %v1858 = vunpack.c.l.b16 %v1698
    %v1859 = vunpack.c.h.b16 %v1698
    %v1860 = vunpack.c.l.b16 %v1699
    %v1861 = vunpack.c.h.b16 %v1699
    %v1862 = vunpack.c.l.b16 %v1700
    %v1863 = vunpack.c.h.b16 %v1700
    %v1864 = vunpack.c.l.b16 %v1701
    %v1865 = vunpack.c.h.b16 %v1701
    %v1866 = vunpack.c.l.b16 %v1702
    %v1867 = vunpack.c.h.b16 %v1702
    %v1868 = vunpack.c.l.b16 %v1703
    %v1869 = vunpack.c.h.b16 %v1703
    %v1870 = vunpack.c.l.b16 %v1704
    %v1871 = vunpack.c.h.b16 %v1704
    %v1872 = vunpack.c.l.b16 %v1705
    %v1873 = vunpack.c.h.b16 %v1705
    %v1874 = vunpack.c.l.b16 %v1706
    %v1875 = vunpack.c.h.b16 %v1706
    %v1876 = vunpack.c.l.b16 %v1707
    %v1877 = vunpack.c.h.b16 %v1707
    %v1878 = vunpack.c.l.b16 %v1708
    %v1879 = vunpack.c.h.b16 %v1708
    %v1880 = vunpack.c.l.b16 %v1709
    %v1881 = vunpack.c.h.b16 %v1709
    %v1882 = vunpack.c.l.b16 %v1710
    %v1883 = vunpack.c.h.b16 %v1710
    %v1884 = vunpack.c.l.b16 %v1711
    %v1885 = vunpack.c.h.b16 %v1711
    %v1886 = vunpack.c.l.b16 %v1712
    %v1887 = vunpack.c.h.b16 %v1712
    %v1888 = vunpack.c.l.b16 %v1713
    %v1889 = vunpack.c.h.b16 %v1713
    %v1890 = vunpack.c.l.b16 %v1714
    %v1891 = vunpack.c.h.b16 %v1714
    %v1892 = vunpack.c.l.b16 %v1715
    %v1893 = vunpack.c.h.b16 %v1715
    %v1894 = vunpack.c.l.b16 %v1716
    %v1895 = vunpack.c.h.b16 %v1716
    %v1896 = vunpack.c.l.b16 %v1717
    %v1897 = vunpack.c.h.b16 %v1717
    %v1898 = vunpack.c.l.b16 %v1718
    %v1899 = vunpack.c.h.b16 %v1718
    %v1900 = vunpack.c.l.b16 %v1719
    %v1901 = vunpack.c.h.b16 %v1719
    %v1902 = vunpack.c.l.b16 %v1720
    %v1903 = vunpack.c.h.b16 %v1720
    %v1904 = vunpack.c.l.b16 %v1721
    %v1905 = vunpack.c.h.b16 %v1721
    %v1906 = vunpack.c.l.b16 %v1722
    %v1907 = vunpack.c.h.b16 %v1722
    %v1908 = vunpack.c.l.b16 %v1723
    %v1909 = vunpack.c.h.b16 %v1723
    %v1910 = vunpack.c.l.b16 %v1724
    %v1911 = vunpack.c.h.b16 %v1724
    %v1912 = vunpack.c.l.b16 %v1725
    %v1913 = vunpack.c.h.b16 %v1725
    %v1914 = vunpack.c.l.b16 %v1726
    %v1915 = vunpack.c.h.b16 %v1726
    %v1916 = vunpack.c.l.b16 %v1727
    %v1917 = vunpack.c.h.b16 %v1727
    %v1918 = vunpack.c.l.b16 %v1728
    %v1919 = vunpack.c.h.b16 %v1728
    %v1920 = vunpack.c.l.b16 %v1729
    %v1921 = vunpack.c.h.b16 %v1729
    %v1922 = vunpack.c.l.b16 %v1730
    %v1923 = vunpack.c.h.b16 %v1730
    %v1924 = vunpack.c.l.b16 %v1731
    %v1925 = vunpack.c.h.b16 %v1731
    %v1926 = vunpack.c.l.b16 %v1732
    %v1927 = vunpack.c.h.b16 %v1732
    %v1928 = vunpack.c.l.b16 %v1733
    %v1929 = vunpack.c.h.b16 %v1733
    %v1930 = vunpack.c.l.b16 %v1734
    %v1931 = vunpack.c.h.b16 %v1734
    %v1932 = vunpack.c.l.b16 %v1735
    %v1933 = vunpack.c.h.b16 %v1735
    %v1934 = vpack.c.b16 %v1808, %v1806
    %v1935 = vpack.c.b16 %v1809, %v1807
    %v1936 = vpack.c.b16 %v1812, %v1810
    %v1937 = vpack.c.b16 %v1813, %v1811
    %v1938 = vpack.c.b16 %v1816, %v1814
    %v1939 = vpack.c.b16 %v1817, %v1815
    %v1940 = vpack.c.b16 %v1820, %v1818
    %v1941 = vpack.c.b16 %v1821, %v1819
    %v1942 = vpack.c.b16 %v1824, %v1822
    %v1943 = vpack.c.b16 %v1825, %v1823
    %v1944 = vpack.c.b16 %v1828, %v1826
    %v1945 = vpack.c.b16 %v1829, %v1827
    %v1946 = vpack.c.b16 %v1832, %v1830
    %v1947 = vpack.c.b16 %v1833, %v1831
    %v1948 = vpack.c.b16 %v1836, %v1834
    %v1949 = vpack.c.b16 %v1837, %v1835
    %v1950 = vpack.c.b16 %v1840, %v1838
    %v1951 = vpack.c.b16 %v1841, %v1839
    %v1952 = vpack.c.b16 %v1844, %v1842
    %v1953 = vpack.c.b16 %v1845, %v1843
    %v1954 = vpack.c.b16 %v1848, %v1846
    %v1955 = vpack.c.b16 %v1849, %v1847
    %v1956 = vpack.c.b16 %v1852, %v1850
    %v1957 = vpack.c.b16 %v1853, %v1851
    %v1958 = vpack.c.b16 %v1856, %v1854
    %v1959 = vpack.c.b16 %v1857, %v1855
    %v1960 = vpack.c.b16 %v1860, %v1858
    %v1961 = vpack.c.b16 %v1861, %v1859
    %v1962 = vpack.c.b16 %v1864, %v1862
    %v1963 = vpack.c.b16 %v1865, %v1863
    %v1964 = vpack.c.b16 %v1868, %v1866
    %v1965 = vpack.c.b16 %v1869, %v1867
    %v1966 = vpack.c.b16 %v1872, %v1870
    %v1967 = vpack.c.b16 %v1873, %v1871
    %v1968 = vpack.c.b16 %v1876, %v1874
    %v1969 = vpack.c.b16 %v1877, %v1875
    %v1970 = vpack.c.b16 %v1880, %v1878
    %v1971 = vpack.c.b16 %v1881, %v1879
    %v1972 = vpack.c.b16 %v1884, %v1882
    %v1973 = vpack.c.b16 %v1885, %v1883
    %v1974 = vpack.c.b16 %v1888, %v1886
    %v1975 = vpack.c.b16 %v1889, %v1887
    %v1976 = vpack.c.b16 %v1892, %v1890
    %v1977 = vpack.c.b16 %v1893, %v1891
    %v1978 = vpack.c.b16 %v1896, %v1894
    %v1979 = vpack.c.b16 %v1897, %v1895
    %v1980 = vpack.c.b16 %v1900, %v1898
    %v1981 = vpack.c.b16 %v1901, %v1899
    %v1982 = vpack.c.b16 %v1904, %v1902
    %v1983 = vpack.c.b16 %v1905, %v1903
    %v1984 = vpack.c.b16 %v1908, %v1906
    %v1985 = vpack.c.b16 %v1909, %v1907
    %v1986 = vpack.c.b16 %v1912, %v1910
    %v1987 = vpack.c.b16 %v1913, %v1911
    %v1988 = vpack.c.b16 %v1916, %v1914
    %v1989 = vpack.c.b16 %v1917, %v1915
    %v1990 = vpack.c.b16 %v1920, %v1918
    %v1991 = vpack.c.b16 %v1921, %v1919
    %v1992 = vpack.c.b16 %v1924, %v1922
    %v1993 = vpack.c.b16 %v1925, %v1923
    %v1994 = vpack.c.b16 %v1928, %v1926
    %v1995 = vpack.c.b16 %v1929, %v1927
    %v1996 = vpack.c.b16 %v1932, %v1930
    %v1997 = vpack.c.b16 %v1933, %v1931
    %2062 = vmatpush.bf16.msra.mxu0 %v1948
    %2063 = vmatpush.bf16.msra.mxu0 %v1946
    %2064 = vmatpush.bf16.msra.mxu0 %v1944
    %2065 = vmatpush.bf16.msra.mxu0 %v1942
    %2066 = vmatpush.bf16.msra.mxu0 %v1940
    %2067 = vmatpush.bf16.msra.mxu0 %v1938
    %2068 = vmatpush.bf16.msra.mxu0 %v1936
    %2069 = vmatpush.bf16.msra.mxu0 %v1934
    %2070 = vmatmul.bf16.gmra.mxu0 %v1668
    %v2071 = vpop.f32.mrf.mxu0
    %v2072 = vadd.f32 %v1738, %v2071
    %v2073 = vpop.f32.mrf.mxu0
    %2074 = vdwg.mxu0
    %2075 = vmatpush.bf16.msra.mxu0 %v1964
    %2076 = vmatpush.bf16.msra.mxu0 %v1962
    %2077 = vmatpush.bf16.msra.mxu0 %v1960
    %2078 = vmatpush.bf16.msra.mxu0 %v1958
    %2079 = vmatpush.bf16.msra.mxu0 %v1956
    %2080 = vmatpush.bf16.msra.mxu0 %v1954
    %2081 = vmatpush.bf16.msra.mxu0 %v1952
    %2082 = vmatpush.bf16.msra.mxu0 %v1950
    %2083 = vmatmul.bf16.gmra.mxu0 %v1669
    %v2084 = vpop.f32.mrf.mxu0
    %v2085 = vadd.f32 %v2072, %v2084
    %v2086 = vpop.f32.mrf.mxu0
    %2087 = vdwg.mxu0
    %2088 = vmatpush.bf16.msra.mxu0 %v1980
    %2089 = vmatpush.bf16.msra.mxu0 %v1978
    %2090 = vmatpush.bf16.msra.mxu0 %v1976
    %2091 = vmatpush.bf16.msra.mxu0 %v1974
    %2092 = vmatpush.bf16.msra.mxu0 %v1972
    %2093 = vmatpush.bf16.msra.mxu0 %v1970
    %2094 = vmatpush.bf16.msra.mxu0 %v1968
    %2095 = vmatpush.bf16.msra.mxu0 %v1966
    %2096 = vmatmul.bf16.gmra.mxu0 %v1670
    %v2097 = vpop.f32.mrf.mxu0
    %v2098 = vadd.f32 %v2085, %v2097
    %v2099 = vpop.f32.mrf.mxu0
    %2100 = vdwg.mxu0
    %2101 = vmatpush.bf16.msra.mxu0 %v1996
    %2102 = vmatpush.bf16.msra.mxu0 %v1994
    %2103 = vmatpush.bf16.msra.mxu0 %v1992
    %2104 = vmatpush.bf16.msra.mxu0 %v1990
    %2105 = vmatpush.bf16.msra.mxu0 %v1988
    %2106 = vmatpush.bf16.msra.mxu0 %v1986
    %2107 = vmatpush.bf16.msra.mxu0 %v1984
    %2108 = vmatpush.bf16.msra.mxu0 %v1982
    %2109 = vmatmul.bf16.gmra.mxu0 %v1671
    %v2110 = vpop.f32.mrf.mxu0
    %v2111 = vadd.f32 %v2098, %v2110
    %v2112 = vpop.f32.mrf.mxu0
    %2113 = vdwg.mxu0
    %2114 = vmatpush.bf16.msra.mxu0 %v1949
    %2115 = vmatpush.bf16.msra.mxu0 %v1947
    %2116 = vmatpush.bf16.msra.mxu0 %v1945
    %2117 = vmatpush.bf16.msra.mxu0 %v1943
    %2118 = vmatpush.bf16.msra.mxu0 %v1941
    %2119 = vmatpush.bf16.msra.mxu0 %v1939
    %2120 = vmatpush.bf16.msra.mxu0 %v1937
    %2121 = vmatpush.bf16.msra.mxu0 %v1935
    %2122 = vmatmul.bf16.gmra.mxu0 %v1668
    %v2123 = vpop.f32.mrf.mxu0
    %v2124 = vadd.f32 %v1739, %v2123
    %v2125 = vpop.f32.mrf.mxu0
    %2126 = vdwg.mxu0
    %2127 = vmatpush.bf16.msra.mxu0 %v1965
    %2128 = vmatpush.bf16.msra.mxu0 %v1963
    %2129 = vmatpush.bf16.msra.mxu0 %v1961
    %2130 = vmatpush.bf16.msra.mxu0 %v1959
    %2131 = vmatpush.bf16.msra.mxu0 %v1957
    %2132 = vmatpush.bf16.msra.mxu0 %v1955
    %2133 = vmatpush.bf16.msra.mxu0 %v1953
    %2134 = vmatpush.bf16.msra.mxu0 %v1951
    %2135 = vmatmul.bf16.gmra.mxu0 %v1669
    %v2136 = vpop.f32.mrf.mxu0
    %v2137 = vadd.f32 %v2124, %v2136
    %v2138 = vpop.f32.mrf.mxu0
    %2139 = vdwg.mxu0
    %2140 = vmatpush.bf16.msra.mxu0 %v1981
    %2141 = vmatpush.bf16.msra.mxu0 %v1979
    %2142 = vmatpush.bf16.msra.mxu0 %v1977
    %2143 = vmatpush.bf16.msra.mxu0 %v1975
    %2144 = vmatpush.bf16.msra.mxu0 %v1973
    %2145 = vmatpush.bf16.msra.mxu0 %v1971
    %2146 = vmatpush.bf16.msra.mxu0 %v1969
    %2147 = vmatpush.bf16.msra.mxu0 %v1967
    %2148 = vmatmul.bf16.gmra.mxu0 %v1670
    %v2149 = vpop.f32.mrf.mxu0
    %v2150 = vadd.f32 %v2137, %v2149
    %v2151 = vpop.f32.mrf.mxu0
    %2152 = vdwg.mxu0
    %2153 = vmatpush.bf16.msra.mxu0 %v1997
    %2154 = vmatpush.bf16.msra.mxu0 %v1995
    %2155 = vmatpush.bf16.msra.mxu0 %v1993
    %2156 = vmatpush.bf16.msra.mxu0 %v1991
    %2157 = vmatpush.bf16.msra.mxu0 %v1989
    %2158 = vmatpush.bf16.msra.mxu0 %v1987
    %2159 = vmatpush.bf16.msra.mxu0 %v1985
    %2160 = vmatpush.bf16.msra.mxu0 %v1983
    %2161 = vmatmul.bf16.gmra.mxu0 %v1671
    %v2162 = vpop.f32.mrf.mxu0
    %v2163 = vadd.f32 %v2150, %v2162
    %v2164 = vpop.f32.mrf.mxu0
    %2165 = vdwg.mxu0
    %v2166 = vsub.f32 0.0, %v2111
    %v2167 = vsub.f32 0.0, %v2163
    %v2168 = vmul.f32 %v2166, 1.442695
    %v2169 = vpow.pop %v2168
    %v2170 = vmul.f32 %v2167, 1.442695
    %v2171 = vpow.pop %v2170
    %v2172 = vadd.f32 %v2169, 1.0
    %v2173 = vadd.f32 %v2171, 1.0
    %v2174 = vrcp.pop %v2172
    %v2175 = vrcp.pop %v2173
    %v2176 = vpack.c.bf16 %v2174, %v2174
    %v2177 = vpack.c.bf16 %v2175, %v2175
    %v2178 = vld [vmem:[#allocation6] sm:$0xf]
    %v2179 = vld [vmem:[#allocation6 + $0x4] sm:$0xf]
    %v2180 = vld [vmem:[#allocation6 + $0x8] sm:$0xf]
    %v2181 = vld [vmem:[#allocation6 + $0xc] sm:$0xf]
    %v2182 = vld [vmem:[#allocation6 + $0x10] sm:$0xf]
    %v2183 = vld [vmem:[#allocation6 + $0x14] sm:$0xf]
    %v2184 = vld [vmem:[#allocation6 + $0x18] sm:$0xf]
    %v2185 = vld [vmem:[#allocation6 + $0x1c] sm:$0xf]
    %v2186 = vld [vmem:[#allocation6 + $0x20] sm:$0xf]
    %v2187 = vld [vmem:[#allocation6 + $0x24] sm:$0xf]
    %v2188 = vld [vmem:[#allocation6 + $0x28] sm:$0xf]
    %v2189 = vld [vmem:[#allocation6 + $0x2c] sm:$0xf]
    %v2190 = vld [vmem:[#allocation6 + $0x30] sm:$0xf]
    %v2191 = vld [vmem:[#allocation6 + $0x34] sm:$0xf]
    %v2192 = vld [vmem:[#allocation6 + $0x38] sm:$0xf]
    %v2193 = vld [vmem:[#allocation6 + $0x3c] sm:$0xf]
    %v2194 = vld [vmem:[#allocation6 + $0x40] sm:$0xf]
    %v2195 = vld [vmem:[#allocation6 + $0x44] sm:$0xf]
    %v2196 = vld [vmem:[#allocation6 + $0x48] sm:$0xf]
    %v2197 = vld [vmem:[#allocation6 + $0x4c] sm:$0xf]
    %v2198 = vld [vmem:[#allocation6 + $0x50] sm:$0xf]
    %v2199 = vld [vmem:[#allocation6 + $0x54] sm:$0xf]
    %v2200 = vld [vmem:[#allocation6 + $0x58] sm:$0xf]
    %v2201 = vld [vmem:[#allocation6 + $0x5c] sm:$0xf]
    %v2202 = vld [vmem:[#allocation6 + $0x60] sm:$0xf]
    %v2203 = vld [vmem:[#allocation6 + $0x64] sm:$0xf]
    %v2204 = vld [vmem:[#allocation6 + $0x68] sm:$0xf]
    %v2205 = vld [vmem:[#allocation6 + $0x6c] sm:$0xf]
    %v2206 = vld [vmem:[#allocation6 + $0x70] sm:$0xf]
    %v2207 = vld [vmem:[#allocation6 + $0x74] sm:$0xf]
    %v2208 = vld [vmem:[#allocation6 + $0x78] sm:$0xf]
    %v2209 = vld [vmem:[#allocation6 + $0x7c] sm:$0xf]
    %v2210 = vld [vmem:[%s6] sm:$0x1]
    %v2212 = vperm.slane %v2210, 0
    %v2246 = vunpack.c.l.b16 %v2178
    %v2247 = vunpack.c.l.b16 %v2179
    %v2248 = vunpack.c.l.b16 %v2180
    %v2249 = vunpack.c.l.b16 %v2181
    %v2250 = vunpack.c.l.b16 %v2182
    %v2251 = vunpack.c.l.b16 %v2183
    %v2252 = vunpack.c.l.b16 %v2184
    %v2253 = vunpack.c.l.b16 %v2185
    %v2254 = vunpack.c.l.b16 %v2186
    %v2255 = vunpack.c.l.b16 %v2187
    %v2256 = vunpack.c.l.b16 %v2188
    %v2257 = vunpack.c.l.b16 %v2189
    %v2258 = vunpack.c.l.b16 %v2190
    %v2259 = vunpack.c.l.b16 %v2191
    %v2260 = vunpack.c.l.b16 %v2192
    %v2261 = vunpack.c.l.b16 %v2193
    %v2262 = vunpack.c.l.b16 %v2194
    %v2263 = vunpack.c.l.b16 %v2195
    %v2264 = vunpack.c.l.b16 %v2196
    %v2265 = vunpack.c.l.b16 %v2197
    %v2266 = vunpack.c.l.b16 %v2198
    %v2267 = vunpack.c.l.b16 %v2199
    %v2268 = vunpack.c.l.b16 %v2200
    %v2269 = vunpack.c.l.b16 %v2201
    %v2270 = vunpack.c.l.b16 %v2202
    %v2271 = vunpack.c.l.b16 %v2203
    %v2272 = vunpack.c.l.b16 %v2204
    %v2273 = vunpack.c.l.b16 %v2205
    %v2274 = vunpack.c.l.b16 %v2206
    %v2275 = vunpack.c.l.b16 %v2207
    %v2276 = vunpack.c.l.b16 %v2208
    %v2277 = vunpack.c.l.b16 %v2209
    %v2278 = vpack.c.b16 %v2247, %v2246
    %v2279 = vpack.c.b16 %v2249, %v2248
    %v2280 = vpack.c.b16 %v2251, %v2250
    %v2281 = vpack.c.b16 %v2253, %v2252
    %v2282 = vpack.c.b16 %v2255, %v2254
    %v2283 = vpack.c.b16 %v2257, %v2256
    %v2284 = vpack.c.b16 %v2259, %v2258
    %v2285 = vpack.c.b16 %v2261, %v2260
    %v2286 = vpack.c.b16 %v2263, %v2262
    %v2287 = vpack.c.b16 %v2265, %v2264
    %v2288 = vpack.c.b16 %v2267, %v2266
    %v2289 = vpack.c.b16 %v2269, %v2268
    %v2290 = vpack.c.b16 %v2271, %v2270
    %v2291 = vpack.c.b16 %v2273, %v2272
    %v2292 = vpack.c.b16 %v2275, %v2274
    %v2293 = vpack.c.b16 %v2277, %v2276
    %2310 = vmatpush.bf16.msra.mxu0 %v2285
    %2311 = vmatpush.bf16.msra.mxu0 %v2284
    %2312 = vmatpush.bf16.msra.mxu0 %v2283
    %2313 = vmatpush.bf16.msra.mxu0 %v2282
    %2314 = vmatpush.bf16.msra.mxu0 %v2281
    %2315 = vmatpush.bf16.msra.mxu0 %v2280
    %2316 = vmatpush.bf16.msra.mxu0 %v2279
    %2317 = vmatpush.bf16.msra.mxu0 %v2278
    %2318 = vmatmul.bf16.gmra.mxu0 %v2176
    %v2319 = vpop.f32.mrf.mxu0
    %v2320 = vadd.f32 %v2212, %v2319
    %v2321 = vpop.f32.mrf.mxu0
    %2322 = vdwg.mxu0
    %2323 = vmatpush.bf16.msra.mxu0 %v2293
    %2324 = vmatpush.bf16.msra.mxu0 %v2292
    %2325 = vmatpush.bf16.msra.mxu0 %v2291
    %2326 = vmatpush.bf16.msra.mxu0 %v2290
    %2327 = vmatpush.bf16.msra.mxu0 %v2289
    %2328 = vmatpush.bf16.msra.mxu0 %v2288
    %2329 = vmatpush.bf16.msra.mxu0 %v2287
    %2330 = vmatpush.bf16.msra.mxu0 %v2286
    %2331 = vmatmul.bf16.gmra.mxu0 %v2177
    %v2332 = vpop.f32.mrf.mxu0
    %v2333 = vadd.f32 %v2320, %v2332
    %v2334 = vpop.f32.mrf.mxu0
    %2335 = vdwg.mxu0
    %v2336 = vsub.f32 0.0, %v2333
    %v2337 = vmul.f32 %v2336, 1.442695
    %v2338 = vpow.pop %v2337
    %v2339 = vadd.f32 %v2338, 1.0
    %v2340 = vrcp.pop %v2339
    %v2341 = vpack.c.bf16 %v2340, %v2340
    %v2342 = vld [vmem:[%s7] sm:$0xf]
    %v2343 = vld [vmem:[%s7 + $0x4] sm:$0xf]
    %v2344 = vld [vmem:[%s7 + $0x8] sm:$0xf]
    %v2345 = vld [vmem:[%s7 + $0xc] sm:$0xf]
    %v2346 = vld [vmem:[%s7 + $0x10] sm:$0xf]
    %v2347 = vld [vmem:[%s7 + $0x14] sm:$0xf]
    %v2348 = vld [vmem:[%s7 + $0x18] sm:$0xf]
    %v2349 = vld [vmem:[%s7 + $0x1c] sm:$0xf]
    %v2350 = vld [vmem:[%s7 + $0x20] sm:$0xf]
    %v2351 = vld [vmem:[%s7 + $0x24] sm:$0xf]
    %v2352 = vld [vmem:[%s7 + $0x28] sm:$0xf]
    %v2353 = vld [vmem:[%s7 + $0x2c] sm:$0xf]
    %v2354 = vld [vmem:[%s7 + $0x30] sm:$0xf]
    %v2355 = vld [vmem:[%s7 + $0x34] sm:$0xf]
    %v2356 = vld [vmem:[%s7 + $0x38] sm:$0xf]
    %v2357 = vld [vmem:[%s7 + $0x3c] sm:$0xf]
    %v2358 = vld [vmem:[%s8] sm:$0x1]
    %v2360 = vperm.slane %v2358, 0
    %v2378 = vunpack.c.l.b16 %v2342
    %v2379 = vunpack.c.l.b16 %v2343
    %v2380 = vunpack.c.l.b16 %v2344
    %v2381 = vunpack.c.l.b16 %v2345
    %v2382 = vunpack.c.l.b16 %v2346
    %v2383 = vunpack.c.l.b16 %v2347
    %v2384 = vunpack.c.l.b16 %v2348
    %v2385 = vunpack.c.l.b16 %v2349
    %v2386 = vunpack.c.l.b16 %v2350
    %v2387 = vunpack.c.l.b16 %v2351
    %v2388 = vunpack.c.l.b16 %v2352
    %v2389 = vunpack.c.l.b16 %v2353
    %v2390 = vunpack.c.l.b16 %v2354
    %v2391 = vunpack.c.l.b16 %v2355
    %v2392 = vunpack.c.l.b16 %v2356
    %v2393 = vunpack.c.l.b16 %v2357
    %v2394 = vpack.c.b16 %v2379, %v2378
    %v2395 = vpack.c.b16 %v2381, %v2380
    %v2396 = vpack.c.b16 %v2383, %v2382
    %v2397 = vpack.c.b16 %v2385, %v2384
    %v2398 = vpack.c.b16 %v2387, %v2386
    %v2399 = vpack.c.b16 %v2389, %v2388
    %v2400 = vpack.c.b16 %v2391, %v2390
    %v2401 = vpack.c.b16 %v2393, %v2392
    %2410 = vmatpush.bf16.msra.mxu0 %v2401
    %2411 = vmatpush.bf16.msra.mxu0 %v2400
    %2412 = vmatpush.bf16.msra.mxu0 %v2399
    %2413 = vmatpush.bf16.msra.mxu0 %v2398
    %2414 = vmatpush.bf16.msra.mxu0 %v2397
    %2415 = vmatpush.bf16.msra.mxu0 %v2396
    %2416 = vmatpush.bf16.msra.mxu0 %v2395
    %2417 = vmatpush.bf16.msra.mxu0 %v2394
    %2418 = vmatmul.bf16.gmra.mxu0 %v2341
    %v2419 = vpop.f32.mrf.mxu0
    %v2420 = vadd.f32 %v2360, %v2419
    %v2421 = vpop.f32.mrf.mxu0
    %2422 = vdwg.mxu0
    %vm2423 = vcmask 80896
    %2424 = vst.msk [vmem:[%s9] sm:$0xff] %vm2423, %v2420
    // Predicated region
    $region50: #{dbn_forward.1} parent=1 // pred_check
      _
    $region51: #{dbn_forward.1} parent=1 // pred_check_branch
      %2426 = sbr.rel (0) target = $region53
    $region52: #{dbn_forward.1} parent=1 // pred_region
      _
    $region53: #{dbn_forward.1} parent=1 // pred_fallthru
      _
    // Predicated region
    $region54: #{dbn_forward.1} parent=1 // pred_check
      _
    $region55: #{dbn_forward.1} parent=1 // pred_check_branch
      %2428 = sbr.rel (0) target = $region57
    $region56: #{dbn_forward.1} parent=1 // pred_region
      _
    $region57: #{dbn_forward.1} parent=1 // pred_fallthru
      _
    %2429 = vsyncpa [#allocation3], 1
    %2430 = vsyncpa [#allocation5], 1

</llo_original>
